<compile_context>
chip_gen: v6e
topology: v6e:2x2x1
jax: 0.10.0
libtpu: 0.0.40
codegen_flags: <defaults>
</compile_context>

<pallas_src>
import math

import jax
import jax.numpy as jnp
import numpy as np
from jax import lax
from jax.experimental import pallas as pl
from jax.experimental.pallas import tpu as pltpu

# ---- module hyper-params (consistent with the PyTorch module) ---------------
DIM = 4                       # input/output channels
HEADS = 4
DIM_HEAD = 32
HIDDEN = HEADS * DIM_HEAD     # 128
SCALE = DIM_HEAD ** (-0.5)
SQRT_DIM = math.sqrt(DIM)
B, H, W = 2, 16, 16
N = H * W                     # 256 spatial positions (lane axis)
EPS = 1e-12                   # F.normalize default eps


def _head_block_mask():
    """(HIDDEN, HIDDEN) block-diagonal mask with SCALE on the diagonal blocks.
    For a power-of-two block size, rows i, j share a DIM_HEAD-block iff
    (i ^ j) < DIM_HEAD -- avoids any vector integer division in the lowering."""
    r = lax.broadcasted_iota(jnp.int32, (HIDDEN, HIDDEN), 0)
    c = lax.broadcasted_iota(jnp.int32, (HIDDEN, HIDDEN), 1)
    return jnp.where((r ^ c) < DIM_HEAD, jnp.float32(SCALE), jnp.float32(0.0))


def _attend_one(x, wqkv, wout, bout, gain, ctx_mask):
    """One batch element, channels-first: x (DIM, N) -> y (DIM, N)."""
    n = x.shape[1]

    # 1x1 conv == channel matmul.  K=4 contraction depth badly underfills the
    # MXU (4/256 on v6e/v7x); accepted knowingly -- the VPU broadcast-MAC form
    # is ~100 vregs of VALU work and was not clearly better at this size.
    qkv = jnp.dot(wqkv, x, preferred_element_type=jnp.float32)          # (384, N)
    q = qkv[0:HIDDEN, :]                                                 # (128, N)
    k = qkv[HIDDEN:2 * HIDDEN, :]                                        # (128, N)
    v = qkv[2 * HIDDEN:3 * HIDDEN, :]                                    # (128, N)

    # torch: q.softmax(dim=-2) over dim_head.  Head-batched: reduce over axis 1
    # of the (HEADS, DIM_HEAD, N) view; exp runs on the full 32-vreg slab.
    # Division only touches the reduced (HEADS, 1, N) denominator.
    q3 = q.reshape(HEADS, DIM_HEAD, n)
    q3 = jnp.exp(q3 - jnp.max(q3, axis=1, keepdims=True))
    q3 = q3 * (1.0 / jnp.sum(q3, axis=1, keepdims=True))
    q = q3.reshape(HIDDEN, n)

    # torch: k.softmax(dim=-1) over spatial (lane axis) -- head-independent,
    # so the full (128, N) slab works directly.
    k = jnp.exp(k - jnp.max(k, axis=1, keepdims=True))
    k = k * (1.0 / jnp.sum(k, axis=1, keepdims=True))

    # All heads in one MXU pass: ctx_t[e, d] = sum_n v[e, n] * k[d, n]
    # (lane-axis contraction).  Off-block-diagonal (cross-head) entries are
    # garbage; ctx_mask zeroes them and folds SCALE in, so the second matmul
    # reduces to the per-head contraction while keeping M=128.
    ctx_t = lax.dot_general(v, k, (((1,), (1,)), ((), ())),
                            preferred_element_type=jnp.float32)          # (128, 128)
    ctx_t = ctx_t * ctx_mask
    # Rows of out_all are head-major (h*dim_head + e): exactly the PyTorch
    # rearrange 'b h c (x y) -> b (h c) x y' ordering -- no concat needed.
    out_all = jnp.dot(ctx_t, q, preferred_element_type=jnp.float32)      # (128, N)

    # to_out 1x1 conv with bias, then RMSNorm over channels (axis 0).
    # F.normalize: y / max(||y||, eps) == y * rsqrt(max(sum y^2, eps^2)).
    y = jnp.dot(wout, out_all, preferred_element_type=jnp.float32) + bout  # (DIM, N)
    sumsq = jnp.sum(y * y, axis=0, keepdims=True)                          # (1, N)
    return y * lax.rsqrt(jnp.maximum(sumsq, EPS * EPS)) * gain             # gain = g*sqrt(DIM)


def _linear_attention_kernel_batched(x_ref, wqkv_ref, wout_ref, params_ref, o_ref):
    # x_ref / o_ref: (1, DIM, N) -- one batch element per grid step (v7x/v4/v5p).
    wqkv = wqkv_ref[...]
    wout = wout_ref[...]
    bout = params_ref[:, 0:1]              # (DIM, 1)
    gain = params_ref[:, 1:2]              # (DIM, 1), already scaled by sqrt(DIM)
    mask = _head_block_mask()
    o_ref[0] = _attend_one(x_ref[0], wqkv, wout, bout, gain, mask).astype(o_ref.dtype)


def _linear_attention_kernel_folded(x_ref, wqkv_ref, wout_ref, params_ref, o_ref):
    # x_ref / o_ref: (B*DIM, N) -- whole batch in a single dense (8,128)-aligned
    # tile (single-TC chips: v5e / v6e).  Weights loaded once, mask hoisted.
    wqkv = wqkv_ref[...]
    wout = wout_ref[...]
    bout = params_ref[:, 0:1]
    gain = params_ref[:, 1:2]
    mask = _head_block_mask()
    nb = x_ref.shape[0] // DIM
    for bi in range(nb):                   # static (2), unrolled
        x = x_ref[bi * DIM:(bi + 1) * DIM, :]
        y = _attend_one(x, wqkv, wout, bout, gain, mask)
        o_ref[bi * DIM:(bi + 1) * DIM, :] = y.astype(o_ref.dtype)


def _use_batch_parallel_grid() -> bool:
    """True on chips with >1 TensorCore visible per device (v7x, megacore
    v4/v5p): give each core one batch element via a 'parallel' grid axis.
    On single-TC chips (v5e / v6e) fold the batch into one grid step instead
    (no per-step overhead, weights loaded once).  Unknown kinds default to the
    batch-parallel grid (safe, merely sequential on a single core)."""
    try:
        kind = jax.devices()[0].device_kind.lower()
    except Exception:
        return True
    multi_tc = ("v7", "7x", "tpu7", "v4", "v5p")                       # explicit v7x detection
    single_tc = ("v5 lite", "v5e", "v5litepod", "v6 lite", "v6e", "trillium", "v2", "v3")
    if any(s in kind for s in multi_tc):
        return True
    if any(s in kind for s in single_tc):
        return False
    return True


def linear_attention(x_nchw, wqkv, wout, bout, g, *, batch_parallel=None):
    """x_nchw: (B, DIM, H, W) f32; weights in natural PyTorch (out, in) layout."""
    b, c, h, w = x_nchw.shape
    n = h * w

    # Pack bias and pre-scaled RMSNorm gain into one tiny (c, 2) input:
    # col 0 = to_out bias, col 1 = g * sqrt(DIM).
    params = jnp.stack([bout, g * SQRT_DIM], axis=1)

    if batch_parallel is None:
        batch_parallel = _use_batch_parallel_grid()
    fold_ok = (b * c) % 8 == 0
    use_folded = fold_ok and not (batch_parallel and b > 1)

    weight_specs = [
        pl.BlockSpec((3 * HIDDEN, c), lambda i: (0, 0)),
        pl.BlockSpec((c, HIDDEN), lambda i: (0, 0)),
        pl.BlockSpec((c, 2), lambda i: (0, 0)),
    ]
    cparams = pltpu.CompilerParams(dimension_semantics=("parallel",))

    if use_folded:
        # (b*c, n) = (8, 256): input and output are each exactly one dense
        # (8,128)-aligned tile -> one DMA each, lane-dense stores.
        x2 = x_nchw.reshape(b * c, n)                       # pure reshape
        out = pl.pallas_call(
            _linear_attention_kernel_folded,
            out_shape=jax.ShapeDtypeStruct((b * c, n), jnp.float32),
            grid_spec=pltpu.PrefetchScalarGridSpec(
                num_scalar_prefetch=0,
                grid=(1,),
                in_specs=[pl.BlockSpec((b * c, n), lambda i: (0, 0))] + weight_specs,
                out_specs=pl.BlockSpec((b * c, n), lambda i: (0, 0)),
            ),
            compiler_params=cparams,
        )(x2, wqkv, wout, params)
        return out.reshape(b, c, h, w)                      # pure reshape back

    # Batch-parallel grid: one batch element per grid step.
    x3 = x_nchw.reshape(b, c, n)                            # pure reshape
    out = pl.pallas_call(
        _linear_attention_kernel_batched,
        out_shape=jax.ShapeDtypeStruct((b, c, n), jnp.float32),
        grid_spec=pltpu.PrefetchScalarGridSpec(
            num_scalar_prefetch=0,
            grid=(b,),
            in_specs=[pl.BlockSpec((1, c, n), lambda i: (i, 0, 0))] + weight_specs,
            out_specs=pl.BlockSpec((1, c, n), lambda i: (i, 0, 0)),
        ),
        compiler_params=cparams,
    )(x3, wqkv, wout, params)
    return out.reshape(b, c, h, w)


def reference_forward(x_nchw, wqkv, wout, bout, g):
    """Pure-JAX mirror of the PyTorch forward, for verification."""
    b, c, h, w = x_nchw.shape
    n = h * w
    qkv = jnp.einsum('oc,bchw->bohw', wqkv, x_nchw)            # (b, 3*HIDDEN, h, w)
    q, k, v = jnp.split(qkv, 3, axis=1)
    reshape = lambda t: t.reshape(b, HEADS, DIM_HEAD, n)
    q, k, v = map(reshape, (q, k, v))
    q = jax.nn.softmax(q, axis=-2) * SCALE
    k = jax.nn.softmax(k, axis=-1)
    ctx = jnp.einsum('bhdn,bhen->bhde', k, v)
    out = jnp.einsum('bhde,bhdn->bhen', ctx, q)
    out = out.reshape(b, HIDDEN, h, w)
    y = jnp.einsum('oc,bchw->bohw', wout, out) + bout[None, :, None, None]
    l2 = jnp.sqrt(jnp.sum(y * y, axis=1, keepdims=True))
    y = y / jnp.maximum(l2, EPS)
    return y * g[None, :, None, None] * SQRT_DIM


if __name__ == "__main__":
    key = jax.random.PRNGKey(0)
    kx, kqkv, kwo, kbo = jax.random.split(key, 4)

    x = jax.random.normal(kx, (B, DIM, H, W), dtype=jnp.float32)

    # Deterministic parameter init (shapes per nn.Conv2d / RMSNorm in __init__),
    # kept in the natural PyTorch (out_channels, in_channels) layout.
    wqkv = jax.random.normal(kqkv, (3 * HIDDEN, DIM), dtype=jnp.float32) * (DIM ** -0.5)
    wout = jax.random.normal(kwo, (DIM, HIDDEN), dtype=jnp.float32) * (HIDDEN ** -0.5)
    bout = jax.random.normal(kbo, (DIM,), dtype=jnp.float32) * 0.1
    g = jnp.ones((DIM,), dtype=jnp.float32)          # RMSNorm gain init = ones

    ref = jax.block_until_ready(reference_forward(x, wqkv, wout, bout, g))

    # Default path for this chip.
    out_auto = jax.block_until_ready(linear_attention(x, wqkv, wout, bout, g))
    np.testing.assert_allclose(np.asarray(out_auto), np.asarray(ref), rtol=1e-4, atol=1e-4)

    # Explicitly exercise BOTH code paths (folded single-step and batch-parallel
    # grid) so each compiles and matches on whatever chip this runs on.
    out_folded = jax.block_until_ready(
        linear_attention(x, wqkv, wout, bout, g, batch_parallel=False))
    np.testing.assert_allclose(np.asarray(out_folded), np.asarray(ref), rtol=1e-4, atol=1e-4)

    out_par = jax.block_until_ready(
        linear_attention(x, wqkv, wout, bout, g, batch_parallel=True))
    np.testing.assert_allclose(np.asarray(out_par), np.asarray(ref), rtol=1e-4, atol=1e-4)

    print("KERNEL_OK")
</pallas_src>

<mosaic_0001>
module attributes {stable_mosaic.version = 11 : i64} {
  func.func @_linear_attention_kernel_batched(%arg0: i32, %arg1: memref<1x4x256xf32, #tpu.memory_space<vmem>>, %arg2: memref<384x4xf32, #tpu.memory_space<vmem>>, %arg3: memref<4x128xf32, #tpu.memory_space<vmem>>, %arg4: memref<4x2xf32, #tpu.memory_space<vmem>>, %arg5: memref<1x4x256xf32, #tpu.memory_space<vmem>>) attributes {dimension_semantics = [#tpu.dimension_semantics<parallel>], iteration_bounds = array<i64: 2>, scalar_prefetch = 0 : i64, scratch_operands = 0 : i64, tpu.core_type = #tpu.core_type<tc>, window_params = [{transform_indices = @transform_0, window_bounds = array<i64: 1, 4, 256>}, {pipeline_mode = #tpu.pipeline_mode<synchronous>, transform_indices = @transform_1, window_bounds = array<i64: 384, 4>}, {pipeline_mode = #tpu.pipeline_mode<synchronous>, transform_indices = @transform_2, window_bounds = array<i64: 4, 128>}, {pipeline_mode = #tpu.pipeline_mode<synchronous>, transform_indices = @transform_3, window_bounds = array<i64: 4, 2>}, {transform_indices = @transform_4, window_bounds = array<i64: 1, 4, 256>}]} {
    %c0 = arith.constant 0 : index
    %c0_0 = arith.constant 0 : index
    %0 = vector.load %arg2[%c0, %c0_0] : memref<384x4xf32, #tpu.memory_space<vmem>>, vector<384x4xf32>
    %c0_1 = arith.constant 0 : index
    %c0_2 = arith.constant 0 : index
    %1 = vector.load %arg3[%c0_1, %c0_2] : memref<4x128xf32, #tpu.memory_space<vmem>>, vector<4x128xf32>
    %c0_3 = arith.constant 0 : index
    %c0_4 = arith.constant 0 : index
    %2 = vector.load %arg4[%c0_3, %c0_4] : memref<4x2xf32, #tpu.memory_space<vmem>>, vector<4x1xf32>
    %c0_5 = arith.constant 0 : index
    %c1 = arith.constant 1 : index
    %3 = vector.load %arg4[%c0_5, %c1] : memref<4x2xf32, #tpu.memory_space<vmem>>, vector<4x1xf32>
    %4 = tpu.iota {dimensions = array<i32: 0>} : vector<128x128xi32>
    %5 = tpu.iota {dimensions = array<i32: 1>} : vector<128x128xi32>
    %6 = arith.xori %4, %5 : vector<128x128xi32>
    %c32_i32 = arith.constant 32 : i32
    %7 = vector.broadcast %c32_i32 : i32 to vector<128x128xi32>
    %8 = arith.cmpi slt, %6, %7 : vector<128x128xi32>
    %cst = arith.constant 0.176776692 : f32
    %cst_6 = arith.constant 0.000000e+00 : f32
    %9 = vector.broadcast %cst : f32 to vector<128x128xf32>
    %10 = vector.broadcast %cst_6 : f32 to vector<128x128xf32>
    %11 = arith.select %8, %9, %10 : vector<128x128xi1>, vector<128x128xf32>
    %c0_7 = arith.constant 0 : index
    %c0_8 = arith.constant 0 : index
    %c0_9 = arith.constant 0 : index
    %12 = vector.load %arg1[%c0_7, %c0_8, %c0_9] : memref<1x4x256xf32, #tpu.memory_space<vmem>>, vector<1x4x256xf32>
    %13 = vector.shape_cast %12 : vector<1x4x256xf32> to vector<4x256xf32>
    %cst_10 = arith.constant dense<0.000000e+00> : vector<384x256xf32>
    %14 = tpu.matmul %0, %13, %cst_10 {dimension_numbers = #tpu.dot_dimension_numbers<[1], [0], [0], [1], [0, 0, 1, 1], [], []>} : vector<384x4xf32>, vector<4x256xf32>, vector<384x256xf32> -> vector<384x256xf32>
    %15 = vector.extract_strided_slice %14 {offsets = [0, 0], sizes = [128, 256], strides = [1, 1]} : vector<384x256xf32> to vector<128x256xf32>
    %16 = vector.extract_strided_slice %14 {offsets = [128, 0], sizes = [128, 256], strides = [1, 1]} : vector<384x256xf32> to vector<128x256xf32>
    %17 = vector.extract_strided_slice %14 {offsets = [256, 0], sizes = [128, 256], strides = [1, 1]} : vector<384x256xf32> to vector<128x256xf32>
    %18 = vector.shape_cast %15 : vector<128x256xf32> to vector<4x32x256xf32>
    %cst_11 = arith.constant dense<0xFF800000> : vector<4x256xf32>
    %19 = vector.multi_reduction <maximumf>, %18, %cst_11 [1] : vector<4x32x256xf32> to vector<4x256xf32>
    %20 = vector.shape_cast %19 : vector<4x256xf32> to vector<4x1x256xf32>
    %21 = vector.broadcast %20 : vector<4x1x256xf32> to vector<4x32x256xf32>
    %22 = arith.subf %18, %21 : vector<4x32x256xf32>
    %23 = math.exp %22 : vector<4x32x256xf32>
    %cst_12 = arith.constant dense<0.000000e+00> : vector<4x256xf32>
    %24 = vector.multi_reduction <add>, %23, %cst_12 [1] : vector<4x32x256xf32> to vector<4x256xf32>
    %25 = vector.shape_cast %24 : vector<4x256xf32> to vector<4x1x256xf32>
    %cst_13 = arith.constant 1.000000e+00 : f32
    %26 = vector.broadcast %cst_13 : f32 to vector<4x1x256xf32>
    %27 = arith.divf %26, %25 : vector<4x1x256xf32>
    %28 = vector.broadcast %27 : vector<4x1x256xf32> to vector<4x32x256xf32>
    %29 = arith.mulf %23, %28 : vector<4x32x256xf32>
    %30 = vector.shape_cast %29 : vector<4x32x256xf32> to vector<128x256xf32>
    %cst_14 = arith.constant dense<0xFF800000> : vector<128xf32>
    %31 = vector.multi_reduction <maximumf>, %16, %cst_14 [1] : vector<128x256xf32> to vector<128xf32>
    %32 = vector.shape_cast %31 : vector<128xf32> to vector<128x1xf32>
    %33 = vector.broadcast %32 : vector<128x1xf32> to vector<128x256xf32>
    %34 = arith.subf %16, %33 : vector<128x256xf32>
    %35 = math.exp %34 : vector<128x256xf32>
    %cst_15 = arith.constant dense<0.000000e+00> : vector<128xf32>
    %36 = vector.multi_reduction <add>, %35, %cst_15 [1] : vector<128x256xf32> to vector<128xf32>
    %37 = vector.shape_cast %36 : vector<128xf32> to vector<128x1xf32>
    %cst_16 = arith.constant 1.000000e+00 : f32
    %38 = vector.broadcast %cst_16 : f32 to vector<128x1xf32>
    %39 = arith.divf %38, %37 : vector<128x1xf32>
    %40 = vector.broadcast %39 : vector<128x1xf32> to vector<128x256xf32>
    %41 = arith.mulf %35, %40 : vector<128x256xf32>
    %cst_17 = arith.constant dense<0.000000e+00> : vector<128x128xf32>
    %42 = tpu.matmul %17, %41, %cst_17 {dimension_numbers = #tpu.dot_dimension_numbers<[1], [1], [0], [0], [0, 0, 1, 0], [], []>} : vector<128x256xf32>, vector<128x256xf32>, vector<128x128xf32> -> vector<128x128xf32>
    %43 = arith.mulf %42, %11 : vector<128x128xf32>
    %cst_18 = arith.constant dense<0.000000e+00> : vector<128x256xf32>
    %44 = tpu.matmul %43, %30, %cst_18 {dimension_numbers = #tpu.dot_dimension_numbers<[1], [0], [0], [1], [0, 0, 1, 1], [], []>} : vector<128x128xf32>, vector<128x256xf32>, vector<128x256xf32> -> vector<128x256xf32>
    %cst_19 = arith.constant dense<0.000000e+00> : vector<4x256xf32>
    %45 = tpu.matmul %1, %44, %cst_19 {dimension_numbers = #tpu.dot_dimension_numbers<[1], [0], [0], [1], [0, 0, 1, 1], [], []>} : vector<4x128xf32>, vector<128x256xf32>, vector<4x256xf32> -> vector<4x256xf32>
    %46 = vector.broadcast %2 : vector<4x1xf32> to vector<4x256xf32>
    %47 = arith.addf %45, %46 : vector<4x256xf32>
    %48 = arith.mulf %47, %47 : vector<4x256xf32>
    %cst_20 = arith.constant dense<0.000000e+00> : vector<256xf32>
    %49 = vector.multi_reduction <add>, %48, %cst_20 [0] : vector<4x256xf32> to vector<256xf32>
    %50 = vector.shape_cast %49 : vector<256xf32> to vector<1x256xf32>
    %cst_21 = arith.constant 1.000000e-24 : f32
    %51 = vector.broadcast %cst_21 : f32 to vector<1x256xf32>
    %52 = arith.maximumf %50, %51 : vector<1x256xf32>
    %53 = math.rsqrt %52 : vector<1x256xf32>
    %54 = vector.broadcast %53 : vector<1x256xf32> to vector<4x256xf32>
    %55 = arith.mulf %47, %54 : vector<4x256xf32>
    %56 = vector.broadcast %3 : vector<4x1xf32> to vector<4x256xf32>
    %57 = arith.mulf %55, %56 : vector<4x256xf32>
    %c0_22 = arith.constant 0 : index
    %c0_23 = arith.constant 0 : index
    %c0_24 = arith.constant 0 : index
    %58 = vector.load %arg5[%c0_22, %c0_23, %c0_24] : memref<1x4x256xf32, #tpu.memory_space<vmem>>, vector<1x4x256xf32>
    %59 = vector.shape_cast %58 : vector<1x4x256xf32> to vector<4x256xf32>
    %60 = vector.shape_cast %57 : vector<4x256xf32> to vector<1x4x256xf32>
    tpu.vector_store %arg5[%c0_22, %c0_23, %c0_24], %60 {strides = array<i32>} : memref<1x4x256xf32, #tpu.memory_space<vmem>>, vector<1x4x256xf32>,
    return
  }
  func.func @transform_0(%arg0: i32) -> (i32, i32, i32) {
    %c0_i32 = arith.constant 0 : i32
    %c0_i32_0 = arith.constant 0 : i32
    %c0_i32_1 = arith.constant 0 : i32
    return %arg0, %c0_i32, %c0_i32_0 : i32, i32, i32
  }
  func.func @transform_1(%arg0: i32) -> (i32, i32) {
    %c0_i32 = arith.constant 0 : i32
    %c0_i32_0 = arith.constant 0 : i32
    %c0_i32_1 = arith.constant 0 : i32
    return %c0_i32, %c0_i32_0 : i32, i32
  }
  func.func @transform_2(%arg0: i32) -> (i32, i32) {
    %c0_i32 = arith.constant 0 : i32
    %c0_i32_0 = arith.constant 0 : i32
    %c0_i32_1 = arith.constant 0 : i32
    return %c0_i32, %c0_i32_0 : i32, i32
  }
  func.func @transform_3(%arg0: i32) -> (i32, i32) {
    %c0_i32 = arith.constant 0 : i32
    %c0_i32_0 = arith.constant 0 : i32
    %c0_i32_1 = arith.constant 0 : i32
    return %c0_i32, %c0_i32_0 : i32, i32
  }
  func.func @transform_4(%arg0: i32) -> (i32, i32, i32) {
    %c0_i32 = arith.constant 0 : i32
    %c0_i32_0 = arith.constant 0 : i32
    %c0_i32_1 = arith.constant 0 : i32
    return %arg0, %c0_i32, %c0_i32_0 : i32, i32, i32
  }
}

</mosaic_0001>

<llo_original>
// kernel: tpu_custom_call.1
$region0: #{tpu_custom_call.1}
  #allocation0 [shape = 'u32[]', space=smem, size = 0x4, offset = 0x4, fixed_abs, tag = 'smem constant byte address 0x4 - core index']
  #allocation1 [shape = 'u32[144,128]{1,0:T(1,128)}', space=vmem, size = 0x12000, scoped, tag = 'internal scratch']
  %s0 = inlined_call_operand.vmem [shape: f32[2,4,256], index: 0, kind: input, shape index: {}]
  %s1 = inlined_call_operand.vmem [shape: f32[384,4], index: 1, kind: input, shape index: {}]
  %s2 = inlined_call_operand.vmem [shape: f32[4,128], index: 2, kind: input, shape index: {}]
  %s3 = inlined_call_operand.vmem [shape: f32[4,2], index: 3, kind: input, shape index: {}]
  %s4 = inlined_call_operand.hbm [shape: f32[2,4,256], index: 4, kind: output, shape index: {}]
  %s5 = sld [smem:[#allocation0]]
  $region49: #{tpu_custom_call.1} parent=0
    _
  %s7 = ssub.s32 1, %s5
  %s8 = scalar_select 0, %s7, %s5
  $region1: #{tpu_custom_call.1} parent=0
    #allocation2 [shape = 'u8[8192]{0}', space=vmem, size = 0x2000, scoped, tag = 'output window, operand 0']
    #allocation3 [shape = 's32[2]{0}', space=sflag, size = 0x8, scoped, tag = 'scoped memory for tpu_custom_call.1']
    %9 = vsyncpa [#allocation3], 0
    %s10 = scalar_lea.sflag [#allocation3], 1
    %11 = vsyncpa %s10, 0
    loop: start=0, step=1, limit=4
    $region2: #{tpu_custom_call.1} parent=1 // loop_pre_header
      _
    $region3: #{tpu_custom_call.1} parent=1 // loop_header
      %s13 = sphi 0, %s17
      %p14 = scmp.ge.s32.totalorder %s13, 4
      %s23 = sphi 0, %s25
      %s26 = sphi 0, %s23
      %s27 = sphi 0, %s26
      %s43 = sphi 0, %s27
      %s47 = sphi 0, %s47
      %s49 = sphi 0, %s47
      %s50 = sphi 0, %s49
      %s64 = sphi 0, %s50
      %s68 = sphi 0, %s68
      %s70 = sphi 0, %s68
      %s71 = sphi 0, %s70
      %s85 = sphi 0, %s71
      %s89 = sphi 0, %s89
      %s91 = sphi 0, %s89
      %s92 = sphi 0, %s91
      %s106 = sphi 0, %s92
      %s112 = sphi 0, %s114
      %s115 = sphi 0, %s112
      %s116 = sphi 0, %s115
      %s132 = sphi 0, %s116
    $region4: #{tpu_custom_call.1} parent=1 // loop_header_branch
      %16 = sbr.rel (%p14) target = $region8
    $region5: #{tpu_custom_call.1} parent=1 // loop_body
      %s18 = ssub.s32 %s13, 1
      %s19 = ssub.s32 %s13, 2
      %s20 = sadd.s32 %s13, 1
      %s21 = ssub.s32 %s13, %s20
      %p22 = scmp.eq.s32.totalorder %s21, 0
      %s24 = sadd.s32 %s23, 1
      %s25 = scalar_select %p22, %s23, %s24
      %p28 = pneg %p22
      %p29 = scmp.eq.s32.totalorder %s13, 1
      %p30 = por %p28, %p29
      %p31 = scmp.ne.s32.totalorder %s23, %s26
      %p32 = scmp.eq.s32.totalorder %s13, 0
      %p33 = por %p31, %p32
      %p34 = scmp.ne.s32.totalorder %s23, %s26
      %p35 = scmp.eq.s32.totalorder %s18, 1
      %p36 = por %p34, %p35
      %p37 = scmp.ne.s32.totalorder %s26, %s27
      %p38 = scmp.eq.s32.totalorder %s18, 0
      %p39 = por %p37, %p38
      %p40 = scmp.ne.s32.totalorder %s26, %s27
      %p41 = scmp.eq.s32.totalorder %s19, 1
      %p42 = por %p40, %p41
      %p44 = scmp.ne.s32.totalorder %s27, %s43
      %p45 = scmp.eq.s32.totalorder %s19, 0
      %p46 = por %p44, %p45
      %s48 = sadd.s32 %s47, 1
      %p51 = scmp.eq.s32.totalorder %s13, 1
      %p52 = scmp.ne.s32.totalorder %s47, %s49
      %p53 = scmp.eq.s32.totalorder %s13, 0
      %p54 = por %p52, %p53
      %p55 = scmp.ne.s32.totalorder %s47, %s49
      %p56 = scmp.eq.s32.totalorder %s18, 1
      %p57 = por %p55, %p56
      %p58 = scmp.ne.s32.totalorder %s49, %s50
      %p59 = scmp.eq.s32.totalorder %s18, 0
      %p60 = por %p58, %p59
      %p61 = scmp.ne.s32.totalorder %s49, %s50
      %p62 = scmp.eq.s32.totalorder %s19, 1
      %p63 = por %p61, %p62
      %p65 = scmp.ne.s32.totalorder %s50, %s64
      %p66 = scmp.eq.s32.totalorder %s19, 0
      %p67 = por %p65, %p66
      %s69 = sadd.s32 %s68, 1
      %p72 = scmp.eq.s32.totalorder %s13, 1
      %p73 = scmp.ne.s32.totalorder %s68, %s70
      %p74 = scmp.eq.s32.totalorder %s13, 0
      %p75 = por %p73, %p74
      %p76 = scmp.ne.s32.totalorder %s68, %s70
      %p77 = scmp.eq.s32.totalorder %s18, 1
      %p78 = por %p76, %p77
      %p79 = scmp.ne.s32.totalorder %s70, %s71
      %p80 = scmp.eq.s32.totalorder %s18, 0
      %p81 = por %p79, %p80
      %p82 = scmp.ne.s32.totalorder %s70, %s71
      %p83 = scmp.eq.s32.totalorder %s19, 1
      %p84 = por %p82, %p83
      %p86 = scmp.ne.s32.totalorder %s71, %s85
      %p87 = scmp.eq.s32.totalorder %s19, 0
      %p88 = por %p86, %p87
      %s90 = sadd.s32 %s89, 1
      %p93 = scmp.eq.s32.totalorder %s13, 1
      %p94 = scmp.ne.s32.totalorder %s89, %s91
      %p95 = scmp.eq.s32.totalorder %s13, 0
      %p96 = por %p94, %p95
      %p97 = scmp.ne.s32.totalorder %s89, %s91
      %p98 = scmp.eq.s32.totalorder %s18, 1
      %p99 = por %p97, %p98
      %p100 = scmp.ne.s32.totalorder %s91, %s92
      %p101 = scmp.eq.s32.totalorder %s18, 0
      %p102 = por %p100, %p101
      %p103 = scmp.ne.s32.totalorder %s91, %s92
      %p104 = scmp.eq.s32.totalorder %s19, 1
      %p105 = por %p103, %p104
      %p107 = scmp.ne.s32.totalorder %s92, %s106
      %p108 = scmp.eq.s32.totalorder %s19, 0
      %p109 = por %p107, %p108
      %s110 = ssub.s32 %s13, %s20
      %p111 = scmp.eq.s32.totalorder %s110, 0
      %s113 = sadd.s32 %s112, 1
      %s114 = scalar_select %p111, %s112, %s113
      %p117 = pneg %p111
      %p118 = scmp.eq.s32.totalorder %s13, 1
      %p119 = por %p117, %p118
      %p120 = scmp.ne.s32.totalorder %s112, %s115
      %p121 = scmp.eq.s32.totalorder %s13, 0
      %p122 = por %p120, %p121
      %p123 = scmp.ne.s32.totalorder %s112, %s115
      %p124 = scmp.eq.s32.totalorder %s18, 1
      %p125 = por %p123, %p124
      %p126 = scmp.ne.s32.totalorder %s115, %s116
      %p127 = scmp.eq.s32.totalorder %s18, 0
      %p128 = por %p126, %p127
      %p129 = scmp.ne.s32.totalorder %s115, %s116
      %p130 = scmp.eq.s32.totalorder %s19, 1
      %p131 = por %p129, %p130
      %p133 = scmp.ne.s32.totalorder %s116, %s132
      %p134 = scmp.eq.s32.totalorder %s19, 0
      %p135 = por %p133, %p134
      %p136 = scmp.le.s32.totalorder 1, %s13
      %p137 = scmp.lt.s32.totalorder %s13, 3
      %p138 = pnand %p136, %p137
      %p139 = pneg %p138
      // Predicated region
      $region9: #{tpu_custom_call.1} parent=5 // pred_check
        _
      $region10: #{tpu_custom_call.1} parent=5 // pred_check_branch
        %141 = sbr.rel (%p138) target = $region12
      $region11: #{tpu_custom_call.1} parent=5 // pred_region
        %s142 = ssub.s32 %s13, 1
        // Predicated region
        $region13: #{tpu_custom_call.1} parent=11 // pred_check
          %p143 = pneg %p60
        $region14: #{tpu_custom_call.1} parent=11 // pred_check_branch
          %145 = sbr.rel (%p143) target = $region16
        $region15: #{tpu_custom_call.1} parent=11 // pred_region
          _
        $region16: #{tpu_custom_call.1} parent=11 // pred_fallthru
          _
        // Predicated region
        $region17: #{tpu_custom_call.1} parent=11 // pred_check
          %p146 = pneg %p81
        $region18: #{tpu_custom_call.1} parent=11 // pred_check_branch
          %148 = sbr.rel (%p146) target = $region20
        $region19: #{tpu_custom_call.1} parent=11 // pred_region
          _
        $region20: #{tpu_custom_call.1} parent=11 // pred_fallthru
          _
        // Predicated region
        $region21: #{tpu_custom_call.1} parent=11 // pred_check
          %p149 = pneg %p102
        $region22: #{tpu_custom_call.1} parent=11 // pred_check_branch
          %151 = sbr.rel (%p149) target = $region24
        $region23: #{tpu_custom_call.1} parent=11 // pred_region
          _
        $region24: #{tpu_custom_call.1} parent=11 // pred_fallthru
          _
      $region12: #{tpu_custom_call.1} parent=5 // pred_fallthru
        _
      %p152 = scmp.lt.s32.totalorder %s13, 2
      // Predicated region
      $region25: #{tpu_custom_call.1} parent=5 // pred_check
        %p153 = pneg %p152
      $region26: #{tpu_custom_call.1} parent=5 // pred_check_branch
        %155 = sbr.rel (%p153) target = $region28
      $region27: #{tpu_custom_call.1} parent=5 // pred_region
        // Predicated region
        $region29: #{tpu_custom_call.1} parent=27 // pred_check
          %p156 = pneg %p33
        $region30: #{tpu_custom_call.1} parent=27 // pred_check_branch
          %158 = sbr.rel (%p156) target = $region32
        $region31: #{tpu_custom_call.1} parent=27 // pred_region
          %p159 = scmp.lt.s32.totalorder %s13, 1
          %s160 = scalar_select %p159, %s13, 1
          %s161 = smul.addr %s160, 2
          %s162 = smul.addr %s161, 4
          %s163 = scalar_lea.vmem %s0, %s162
        $region32: #{tpu_custom_call.1} parent=27 // pred_fallthru
          _
      $region28: #{tpu_custom_call.1} parent=5 // pred_fallthru
        _
      %p164 = scmp.le.s32.totalorder 1, %s13
      %p165 = scmp.lt.s32.totalorder %s13, 3
      %p166 = pnand %p164, %p165
      %p167 = pneg %p166
      // Predicated region
      $region33: #{tpu_custom_call.1} parent=5 // pred_check
        _
      $region34: #{tpu_custom_call.1} parent=5 // pred_check_branch
        %169 = sbr.rel (%p166) target = $region36
      $region35: #{tpu_custom_call.1} parent=5 // pred_region
        %s170 = ssub.s32 %s13, 1
        %p171 = scmp.lt.s32.totalorder %s18, 1
        %s172 = scalar_select %p171, %s18, 1
        %s173 = smul.addr %s172, 2
        %s174 = smul.addr %s173, 4
        %s175 = scalar_lea.vmem %s0, %s174
        %p176 = pneg %p39
        %p177 = pneg %p36
        %p178 = pneg %p60
        %p179 = pneg %p57
        %p180 = pneg %p81
        %p181 = pneg %p78
        %p182 = pneg %p102
        %p183 = pneg %p99
        %p184 = pneg %p128
        %p185 = pneg %p125
        %s186 = sand.u32 %s115, 1
        %s187 = scalar_lea.sflag [#allocation3], %s186
        %s188 = sand.u32 %s115, 1
        %s189 = smul.addr %s188, 8
        %s190 = scalar_lea.vmem [#allocation2], %s189
        %p191 = scmp.lt.s32.totalorder %s18, 1
        %s192 = scalar_select %p191, %s18, 1
        %s193 = smul.addr %s192, 2
        %s194 = smul.addr %s193, 4
        %s195 = scalar_lea.vmem %s0, %s194
        %v196 = vld [vmem:[%s1] sm:$0xff]
        %v197 = vld [vmem:[%s1 + $0x8] sm:$0xff]
        %v198 = vld [vmem:[%s1 + $0x10] sm:$0xff]
        %v199 = vld [vmem:[%s1 + $0x18] sm:$0xff]
        %v200 = vld [vmem:[%s1 + $0x20] sm:$0xff]
        %v201 = vld [vmem:[%s1 + $0x28] sm:$0xff]
        %v202 = vld [vmem:[%s1 + $0x30] sm:$0xff]
        %v203 = vld [vmem:[%s1 + $0x38] sm:$0xff]
        %v204 = vld [vmem:[%s1 + $0x40] sm:$0xff]
        %v205 = vld [vmem:[%s1 + $0x48] sm:$0xff]
        %v206 = vld [vmem:[%s1 + $0x50] sm:$0xff]
        %v207 = vld [vmem:[%s1 + $0x58] sm:$0xff]
        %v208 = vld [vmem:[%s1 + $0x60] sm:$0xff]
        %v209 = vld [vmem:[%s1 + $0x68] sm:$0xff]
        %v210 = vld [vmem:[%s1 + $0x70] sm:$0xff]
        %v211 = vld [vmem:[%s1 + $0x78] sm:$0xff]
        %v212 = vld [vmem:[%s1 + $0x80] sm:$0xff]
        %v213 = vld [vmem:[%s1 + $0x88] sm:$0xff]
        %v214 = vld [vmem:[%s1 + $0x90] sm:$0xff]
        %v215 = vld [vmem:[%s1 + $0x98] sm:$0xff]
        %v216 = vld [vmem:[%s1 + $0xa0] sm:$0xff]
        %v217 = vld [vmem:[%s1 + $0xa8] sm:$0xff]
        %v218 = vld [vmem:[%s1 + $0xb0] sm:$0xff]
        %v219 = vld [vmem:[%s1 + $0xb8] sm:$0xff]
        %v220 = vld [vmem:[%s1 + $0xc0] sm:$0xff]
        %v221 = vld [vmem:[%s1 + $0xc8] sm:$0xff]
        %v222 = vld [vmem:[%s1 + $0xd0] sm:$0xff]
        %v223 = vld [vmem:[%s1 + $0xd8] sm:$0xff]
        %v224 = vld [vmem:[%s1 + $0xe0] sm:$0xff]
        %v225 = vld [vmem:[%s1 + $0xe8] sm:$0xff]
        %v226 = vld [vmem:[%s1 + $0xf0] sm:$0xff]
        %v227 = vld [vmem:[%s1 + $0xf8] sm:$0xff]
        %v228 = vld [vmem:[%s1 + $0x100] sm:$0xff]
        %v229 = vld [vmem:[%s1 + $0x108] sm:$0xff]
        %v230 = vld [vmem:[%s1 + $0x110] sm:$0xff]
        %v231 = vld [vmem:[%s1 + $0x118] sm:$0xff]
        %v232 = vld [vmem:[%s1 + $0x120] sm:$0xff]
        %v233 = vld [vmem:[%s1 + $0x128] sm:$0xff]
        %v234 = vld [vmem:[%s1 + $0x130] sm:$0xff]
        %v235 = vld [vmem:[%s1 + $0x138] sm:$0xff]
        %v236 = vld [vmem:[%s1 + $0x140] sm:$0xff]
        %v237 = vld [vmem:[%s1 + $0x148] sm:$0xff]
        %v238 = vld [vmem:[%s1 + $0x150] sm:$0xff]
        %v239 = vld [vmem:[%s1 + $0x158] sm:$0xff]
        %v240 = vld [vmem:[%s1 + $0x160] sm:$0xff]
        %v241 = vld [vmem:[%s1 + $0x168] sm:$0xff]
        %v242 = vld [vmem:[%s1 + $0x170] sm:$0xff]
        %v243 = vld [vmem:[%s1 + $0x178] sm:$0xff]
        %v244 = vld [vmem:[%s2] sm:$0xf]
        %v245 = vld [vmem:[%s3] sm:$0xf]
        %v246 = vlaneseq
        %v247 = vshrl.u32 %v246, 7
        %v248 = vadd.s32 %v247, 8
        %v249 = vadd.s32 %v247, 16
        %v250 = vadd.s32 %v247, 24
        %v251 = vadd.s32 %v247, 32
        %v252 = vadd.s32 %v247, 40
        %v253 = vadd.s32 %v247, 48
        %v254 = vadd.s32 %v247, 56
        %v255 = vadd.s32 %v247, 64
        %v256 = vadd.s32 %v247, 72
        %v257 = vadd.s32 %v247, 80
        %v258 = vadd.s32 %v247, 88
        %v259 = vadd.s32 %v247, 96
        %v260 = vadd.s32 %v247, 104
        %v261 = vadd.s32 %v247, 112
        %v262 = vadd.s32 %v247, 120
        %v263 = vlaneseq
        %v264 = vand.u32 %v263, 127
        %v265 = vxor.u32 %v247, %v264
        %v266 = vxor.u32 %v248, %v264
        %v267 = vxor.u32 %v249, %v264
        %v268 = vxor.u32 %v250, %v264
        %v269 = vxor.u32 %v251, %v264
        %v270 = vxor.u32 %v252, %v264
        %v271 = vxor.u32 %v253, %v264
        %v272 = vxor.u32 %v254, %v264
        %v273 = vxor.u32 %v255, %v264
        %v274 = vxor.u32 %v256, %v264
        %v275 = vxor.u32 %v257, %v264
        %v276 = vxor.u32 %v258, %v264
        %v277 = vxor.u32 %v259, %v264
        %v278 = vxor.u32 %v260, %v264
        %v279 = vxor.u32 %v261, %v264
        %v280 = vxor.u32 %v262, %v264
        %vm281 = vcmp.lt.s32.totalorder %v265, 32
        %vm282 = vcmp.lt.s32.totalorder %v266, 32
        %vm283 = vcmp.lt.s32.totalorder %v267, 32
        %vm284 = vcmp.lt.s32.totalorder %v268, 32
        %vm285 = vcmp.lt.s32.totalorder %v269, 32
        %vm286 = vcmp.lt.s32.totalorder %v270, 32
        %vm287 = vcmp.lt.s32.totalorder %v271, 32
        %vm288 = vcmp.lt.s32.totalorder %v272, 32
        %vm289 = vcmp.lt.s32.totalorder %v273, 32
        %vm290 = vcmp.lt.s32.totalorder %v274, 32
        %vm291 = vcmp.lt.s32.totalorder %v275, 32
        %vm292 = vcmp.lt.s32.totalorder %v276, 32
        %vm293 = vcmp.lt.s32.totalorder %v277, 32
        %vm294 = vcmp.lt.s32.totalorder %v278, 32
        %vm295 = vcmp.lt.s32.totalorder %v279, 32
        %vm296 = vcmp.lt.s32.totalorder %v280, 32
        %v297 = vsel %vm281, 0.17677669, 0.0
        %v298 = vsel %vm282, 0.17677669, 0.0
        %v299 = vsel %vm283, 0.17677669, 0.0
        %v300 = vsel %vm284, 0.17677669, 0.0
        %v301 = vsel %vm285, 0.17677669, 0.0
        %v302 = vsel %vm286, 0.17677669, 0.0
        %v303 = vsel %vm287, 0.17677669, 0.0
        %v304 = vsel %vm288, 0.17677669, 0.0
        %v305 = vsel %vm289, 0.17677669, 0.0
        %v306 = vsel %vm290, 0.17677669, 0.0
        %v307 = vsel %vm291, 0.17677669, 0.0
        %v308 = vsel %vm292, 0.17677669, 0.0
        %v309 = vsel %vm293, 0.17677669, 0.0
        %v310 = vsel %vm294, 0.17677669, 0.0
        %v311 = vsel %vm295, 0.17677669, 0.0
        %v312 = vsel %vm296, 0.17677669, 0.0
        %v313 = vld [vmem:[%s195] sm:$0xff]
        %v315 = vcombine.high %v313, %v313
        %vm316 = vcmask 31744
        %v318 = vsel %vm316, %v196, 0
        %v321 = vsel %vm316, %v197, 0
        %v324 = vsel %vm316, %v198, 0
        %v327 = vsel %vm316, %v199, 0
        %v330 = vsel %vm316, %v200, 0
        %v333 = vsel %vm316, %v201, 0
        %v336 = vsel %vm316, %v202, 0
        %v339 = vsel %vm316, %v203, 0
        %v342 = vsel %vm316, %v204, 0
        %v345 = vsel %vm316, %v205, 0
        %v348 = vsel %vm316, %v206, 0
        %v351 = vsel %vm316, %v207, 0
        %v354 = vsel %vm316, %v208, 0
        %v357 = vsel %vm316, %v209, 0
        %v360 = vsel %vm316, %v210, 0
        %v363 = vsel %vm316, %v211, 0
        %v366 = vsel %vm316, %v212, 0
        %v369 = vsel %vm316, %v213, 0
        %v372 = vsel %vm316, %v214, 0
        %v375 = vsel %vm316, %v215, 0
        %v378 = vsel %vm316, %v216, 0
        %v381 = vsel %vm316, %v217, 0
        %v384 = vsel %vm316, %v218, 0
        %v387 = vsel %vm316, %v219, 0
        %v390 = vsel %vm316, %v220, 0
        %v393 = vsel %vm316, %v221, 0
        %v396 = vsel %vm316, %v222, 0
        %v399 = vsel %vm316, %v223, 0
        %v402 = vsel %vm316, %v224, 0
        %v405 = vsel %vm316, %v225, 0
        %v408 = vsel %vm316, %v226, 0
        %v411 = vsel %vm316, %v227, 0
        %v414 = vsel %vm316, %v228, 0
        %v417 = vsel %vm316, %v229, 0
        %v420 = vsel %vm316, %v230, 0
        %v423 = vsel %vm316, %v231, 0
        %v426 = vsel %vm316, %v232, 0
        %v429 = vsel %vm316, %v233, 0
        %v432 = vsel %vm316, %v234, 0
        %v435 = vsel %vm316, %v235, 0
        %v438 = vsel %vm316, %v236, 0
        %v441 = vsel %vm316, %v237, 0
        %v444 = vsel %vm316, %v238, 0
        %v447 = vsel %vm316, %v239, 0
        %v450 = vsel %vm316, %v240, 0
        %v453 = vsel %vm316, %v241, 0
        %v456 = vsel %vm316, %v242, 0
        %v459 = vsel %vm316, %v243, 0
        %vm461 = vcmask 1043456
        %v462 = vsel %vm461, %v313, 0
        %v464 = vsel %vm461, %v315, 0
        %466 = vmatprep.subr.mxu0 0.0
        %467 = vmatpush1.msra.mxu0 0.0
        %468 = vmatprep.subr.mxu0 0.0
        %469 = vmatpush1.msra.mxu0 0.0
        %470 = vmatprep.subr.mxu0 0.0
        %471 = vmatpush1.msra.mxu0 0.0
        %472 = vmatprep.subr.mxu0 0.0
        %473 = vmatpush1.msra.mxu0 0.0
        %474 = vmatprep.subr.mxu0 0.0
        %475 = vmatpush1.msra.mxu0 0.0
        %476 = vmatprep.subr.mxu0 0.0
        %477 = vmatpush1.msra.mxu0 0.0
        %478 = vmatprep.subr.mxu0 0.0
        %479 = vmatpush1.msra.mxu0 0.0
        %480 = vmatprep.subr.mxu0 0.0
        %481 = vmatpush1.msra.mxu0 0.0
        %482 = vmatprep.subr.mxu0 0.0
        %483 = vmatpush1.msra.mxu0 0.0
        %484 = vmatprep.subr.mxu0 0.0
        %485 = vmatpush1.msra.mxu0 0.0
        %486 = vmatprep.subr.mxu0 0.0
        %487 = vmatpush1.msra.mxu0 0.0
        %488 = vmatprep.subr.mxu0 0.0
        %489 = vmatpush1.msra.mxu0 0.0
        %490 = vmatprep.subr.mxu0 0.0
        %491 = vmatpush1.msra.mxu0 0.0
        %492 = vmatprep.subr.mxu0 0.0
        %493 = vmatpush1.msra.mxu0 0.0
        %494 = vmatprep.subr.mxu0 0.0
        %495 = vmatpush1.msra.mxu0 0.0
        %496 = vmatprep.subr.mxu0 %v464
        %497 = vmatpush1.msra.mxu0 %v462
        %498 = vmatprep.subr.mxu0 0.0
        %499 = vmatpush2.msra.mxu0 0.0
        %500 = vmatprep.subr.mxu0 0.0
        %501 = vmatpush2.msra.mxu0 0.0
        %502 = vmatprep.subr.mxu0 0.0
        %503 = vmatpush2.msra.mxu0 0.0
        %504 = vmatprep.subr.mxu0 0.0
        %505 = vmatpush2.msra.mxu0 0.0
        %506 = vmatprep.subr.mxu0 0.0
        %507 = vmatpush2.msra.mxu0 0.0
        %508 = vmatprep.subr.mxu0 0.0
        %509 = vmatpush2.msra.mxu0 0.0
        %510 = vmatprep.subr.mxu0 0.0
        %511 = vmatpush2.msra.mxu0 0.0
        %512 = vmatprep.subr.mxu0 0.0
        %513 = vmatpush2.msra.mxu0 0.0
        %514 = vmatprep.subr.mxu0 0.0
        %515 = vmatpush2.msra.mxu0 0.0
        %516 = vmatprep.subr.mxu0 0.0
        %517 = vmatpush2.msra.mxu0 0.0
        %518 = vmatprep.subr.mxu0 0.0
        %519 = vmatpush2.msra.mxu0 0.0
        %520 = vmatprep.subr.mxu0 0.0
        %521 = vmatpush2.msra.mxu0 0.0
        %522 = vmatprep.subr.mxu0 0.0
        %523 = vmatpush2.msra.mxu0 0.0
        %524 = vmatprep.subr.mxu0 0.0
        %525 = vmatpush2.msra.mxu0 0.0
        %526 = vmatprep.subr.mxu0 0.0
        %527 = vmatpush2.msra.mxu0 0.0
        %528 = vmatprep.subr.mxu0 0.0
        %529 = vmatpush2.msra.mxu0 0.0
        %530 = vmatprep.mubr.f32.mxu0 0.0
        %531 = vmatmul.mubr.f32.gmra.mxu0 %v318
        %v532 = vpop.f32.mrf.mxu0
        %v533 = vadd.f32 0.0, %v532
        %v534 = vpop.f32.mrf.mxu0
        %v535 = vadd.f32 0.0, %v534
        %536 = vmatprep.mubr.f32.mxu0 0.0
        %537 = vmatmul.mubr.f32.gmra.mxu0 %v321
        %v538 = vpop.f32.mrf.mxu0
        %v539 = vadd.f32 0.0, %v538
        %v540 = vpop.f32.mrf.mxu0
        %v541 = vadd.f32 0.0, %v540
        %542 = vmatprep.mubr.f32.mxu0 0.0
        %543 = vmatmul.mubr.f32.gmra.mxu0 %v324
        %v544 = vpop.f32.mrf.mxu0
        %v545 = vadd.f32 0.0, %v544
        %v546 = vpop.f32.mrf.mxu0
        %v547 = vadd.f32 0.0, %v546
        %548 = vmatprep.mubr.f32.mxu0 0.0
        %549 = vmatmul.mubr.f32.gmra.mxu0 %v327
        %v550 = vpop.f32.mrf.mxu0
        %v551 = vadd.f32 0.0, %v550
        %v552 = vpop.f32.mrf.mxu0
        %v553 = vadd.f32 0.0, %v552
        %554 = vmatprep.mubr.f32.mxu0 0.0
        %555 = vmatmul.mubr.f32.gmra.mxu0 %v330
        %v556 = vpop.f32.mrf.mxu0
        %v557 = vadd.f32 0.0, %v556
        %v558 = vpop.f32.mrf.mxu0
        %v559 = vadd.f32 0.0, %v558
        %560 = vmatprep.mubr.f32.mxu0 0.0
        %561 = vmatmul.mubr.f32.gmra.mxu0 %v333
        %v562 = vpop.f32.mrf.mxu0
        %v563 = vadd.f32 0.0, %v562
        %v564 = vpop.f32.mrf.mxu0
        %v565 = vadd.f32 0.0, %v564
        %566 = vmatprep.mubr.f32.mxu0 0.0
        %567 = vmatmul.mubr.f32.gmra.mxu0 %v336
        %v568 = vpop.f32.mrf.mxu0
        %v569 = vadd.f32 0.0, %v568
        %v570 = vpop.f32.mrf.mxu0
        %v571 = vadd.f32 0.0, %v570
        %572 = vmatprep.mubr.f32.mxu0 0.0
        %573 = vmatmul.mubr.f32.gmra.mxu0 %v339
        %v574 = vpop.f32.mrf.mxu0
        %v575 = vadd.f32 0.0, %v574
        %v576 = vpop.f32.mrf.mxu0
        %v577 = vadd.f32 0.0, %v576
        %578 = vmatprep.mubr.f32.mxu0 0.0
        %579 = vmatmul.mubr.f32.gmra.mxu0 %v342
        %v580 = vpop.f32.mrf.mxu0
        %v581 = vadd.f32 0.0, %v580
        %v582 = vpop.f32.mrf.mxu0
        %v583 = vadd.f32 0.0, %v582
        %584 = vmatprep.mubr.f32.mxu0 0.0
        %585 = vmatmul.mubr.f32.gmra.mxu0 %v345
        %v586 = vpop.f32.mrf.mxu0
        %v587 = vadd.f32 0.0, %v586
        %v588 = vpop.f32.mrf.mxu0
        %v589 = vadd.f32 0.0, %v588
        %590 = vmatprep.mubr.f32.mxu0 0.0
        %591 = vmatmul.mubr.f32.gmra.mxu0 %v348
        %v592 = vpop.f32.mrf.mxu0
        %v593 = vadd.f32 0.0, %v592
        %v594 = vpop.f32.mrf.mxu0
        %v595 = vadd.f32 0.0, %v594
        %596 = vmatprep.mubr.f32.mxu0 0.0
        %597 = vmatmul.mubr.f32.gmra.mxu0 %v351
        %v598 = vpop.f32.mrf.mxu0
        %v599 = vadd.f32 0.0, %v598
        %v600 = vpop.f32.mrf.mxu0
        %v601 = vadd.f32 0.0, %v600
        %602 = vmatprep.mubr.f32.mxu0 0.0
        %603 = vmatmul.mubr.f32.gmra.mxu0 %v354
        %v604 = vpop.f32.mrf.mxu0
        %v605 = vadd.f32 0.0, %v604
        %v606 = vpop.f32.mrf.mxu0
        %v607 = vadd.f32 0.0, %v606
        %608 = vmatprep.mubr.f32.mxu0 0.0
        %609 = vmatmul.mubr.f32.gmra.mxu0 %v357
        %v610 = vpop.f32.mrf.mxu0
        %v611 = vadd.f32 0.0, %v610
        %v612 = vpop.f32.mrf.mxu0
        %v613 = vadd.f32 0.0, %v612
        %614 = vmatprep.mubr.f32.mxu0 0.0
        %615 = vmatmul.mubr.f32.gmra.mxu0 %v360
        %v616 = vpop.f32.mrf.mxu0
        %v617 = vadd.f32 0.0, %v616
        %v618 = vpop.f32.mrf.mxu0
        %v619 = vadd.f32 0.0, %v618
        %620 = vmatprep.mubr.f32.mxu0 0.0
        %621 = vmatmul.mubr.f32.gmra.mxu0 %v363
        %v622 = vpop.f32.mrf.mxu0
        %v623 = vadd.f32 0.0, %v622
        %v624 = vpop.f32.mrf.mxu0
        %v625 = vadd.f32 0.0, %v624
        %626 = vmatprep.mubr.f32.mxu0 0.0
        %627 = vmatmul.mubr.f32.gmra.mxu0 %v366
        %v628 = vpop.f32.mrf.mxu0
        %v629 = vadd.f32 0.0, %v628
        %v630 = vpop.f32.mrf.mxu0
        %v631 = vadd.f32 0.0, %v630
        %632 = vmatprep.mubr.f32.mxu0 0.0
        %633 = vmatmul.mubr.f32.gmra.mxu0 %v369
        %v634 = vpop.f32.mrf.mxu0
        %v635 = vadd.f32 0.0, %v634
        %v636 = vpop.f32.mrf.mxu0
        %v637 = vadd.f32 0.0, %v636
        %638 = vmatprep.mubr.f32.mxu0 0.0
        %639 = vmatmul.mubr.f32.gmra.mxu0 %v372
        %v640 = vpop.f32.mrf.mxu0
        %v641 = vadd.f32 0.0, %v640
        %v642 = vpop.f32.mrf.mxu0
        %v643 = vadd.f32 0.0, %v642
        %644 = vmatprep.mubr.f32.mxu0 0.0
        %645 = vmatmul.mubr.f32.gmra.mxu0 %v375
        %v646 = vpop.f32.mrf.mxu0
        %v647 = vadd.f32 0.0, %v646
        %v648 = vpop.f32.mrf.mxu0
        %v649 = vadd.f32 0.0, %v648
        %650 = vmatprep.mubr.f32.mxu0 0.0
        %651 = vmatmul.mubr.f32.gmra.mxu0 %v378
        %v652 = vpop.f32.mrf.mxu0
        %v653 = vadd.f32 0.0, %v652
        %v654 = vpop.f32.mrf.mxu0
        %v655 = vadd.f32 0.0, %v654
        %656 = vmatprep.mubr.f32.mxu0 0.0
        %657 = vmatmul.mubr.f32.gmra.mxu0 %v381
        %v658 = vpop.f32.mrf.mxu0
        %v659 = vadd.f32 0.0, %v658
        %v660 = vpop.f32.mrf.mxu0
        %v661 = vadd.f32 0.0, %v660
        %662 = vmatprep.mubr.f32.mxu0 0.0
        %663 = vmatmul.mubr.f32.gmra.mxu0 %v384
        %v664 = vpop.f32.mrf.mxu0
        %v665 = vadd.f32 0.0, %v664
        %v666 = vpop.f32.mrf.mxu0
        %v667 = vadd.f32 0.0, %v666
        %668 = vmatprep.mubr.f32.mxu0 0.0
        %669 = vmatmul.mubr.f32.gmra.mxu0 %v387
        %v670 = vpop.f32.mrf.mxu0
        %v671 = vadd.f32 0.0, %v670
        %v672 = vpop.f32.mrf.mxu0
        %v673 = vadd.f32 0.0, %v672
        %674 = vmatprep.mubr.f32.mxu0 0.0
        %675 = vmatmul.mubr.f32.gmra.mxu0 %v390
        %v676 = vpop.f32.mrf.mxu0
        %v677 = vadd.f32 0.0, %v676
        %v678 = vpop.f32.mrf.mxu0
        %v679 = vadd.f32 0.0, %v678
        %680 = vmatprep.mubr.f32.mxu0 0.0
        %681 = vmatmul.mubr.f32.gmra.mxu0 %v393
        %v682 = vpop.f32.mrf.mxu0
        %v683 = vadd.f32 0.0, %v682
        %v684 = vpop.f32.mrf.mxu0
        %v685 = vadd.f32 0.0, %v684
        %686 = vmatprep.mubr.f32.mxu0 0.0
        %687 = vmatmul.mubr.f32.gmra.mxu0 %v396
        %v688 = vpop.f32.mrf.mxu0
        %v689 = vadd.f32 0.0, %v688
        %v690 = vpop.f32.mrf.mxu0
        %v691 = vadd.f32 0.0, %v690
        %692 = vmatprep.mubr.f32.mxu0 0.0
        %693 = vmatmul.mubr.f32.gmra.mxu0 %v399
        %v694 = vpop.f32.mrf.mxu0
        %v695 = vadd.f32 0.0, %v694
        %v696 = vpop.f32.mrf.mxu0
        %v697 = vadd.f32 0.0, %v696
        %698 = vmatprep.mubr.f32.mxu0 0.0
        %699 = vmatmul.mubr.f32.gmra.mxu0 %v402
        %v700 = vpop.f32.mrf.mxu0
        %v701 = vadd.f32 0.0, %v700
        %v702 = vpop.f32.mrf.mxu0
        %v703 = vadd.f32 0.0, %v702
        %704 = vmatprep.mubr.f32.mxu0 0.0
        %705 = vmatmul.mubr.f32.gmra.mxu0 %v405
        %v706 = vpop.f32.mrf.mxu0
        %v707 = vadd.f32 0.0, %v706
        %v708 = vpop.f32.mrf.mxu0
        %v709 = vadd.f32 0.0, %v708
        %710 = vmatprep.mubr.f32.mxu0 0.0
        %711 = vmatmul.mubr.f32.gmra.mxu0 %v408
        %v712 = vpop.f32.mrf.mxu0
        %v713 = vadd.f32 0.0, %v712
        %v714 = vpop.f32.mrf.mxu0
        %v715 = vadd.f32 0.0, %v714
        %716 = vmatprep.mubr.f32.mxu0 0.0
        %717 = vmatmul.mubr.f32.gmra.mxu0 %v411
        %v718 = vpop.f32.mrf.mxu0
        %v719 = vadd.f32 0.0, %v718
        %v720 = vpop.f32.mrf.mxu0
        %v721 = vadd.f32 0.0, %v720
        %722 = vmatprep.mubr.f32.mxu0 0.0
        %723 = vmatmul.mubr.f32.gmra.mxu0 %v414
        %v724 = vpop.f32.mrf.mxu0
        %v725 = vadd.f32 0.0, %v724
        %v726 = vpop.f32.mrf.mxu0
        %v727 = vadd.f32 0.0, %v726
        %728 = vmatprep.mubr.f32.mxu0 0.0
        %729 = vmatmul.mubr.f32.gmra.mxu0 %v417
        %v730 = vpop.f32.mrf.mxu0
        %v731 = vadd.f32 0.0, %v730
        %v732 = vpop.f32.mrf.mxu0
        %v733 = vadd.f32 0.0, %v732
        %734 = vmatprep.mubr.f32.mxu0 0.0
        %735 = vmatmul.mubr.f32.gmra.mxu0 %v420
        %v736 = vpop.f32.mrf.mxu0
        %v737 = vadd.f32 0.0, %v736
        %v738 = vpop.f32.mrf.mxu0
        %v739 = vadd.f32 0.0, %v738
        %740 = vmatprep.mubr.f32.mxu0 0.0
        %741 = vmatmul.mubr.f32.gmra.mxu0 %v423
        %v742 = vpop.f32.mrf.mxu0
        %v743 = vadd.f32 0.0, %v742
        %v744 = vpop.f32.mrf.mxu0
        %v745 = vadd.f32 0.0, %v744
        %746 = vmatprep.mubr.f32.mxu0 0.0
        %747 = vmatmul.mubr.f32.gmra.mxu0 %v426
        %v748 = vpop.f32.mrf.mxu0
        %v749 = vadd.f32 0.0, %v748
        %v750 = vpop.f32.mrf.mxu0
        %v751 = vadd.f32 0.0, %v750
        %752 = vmatprep.mubr.f32.mxu0 0.0
        %753 = vmatmul.mubr.f32.gmra.mxu0 %v429
        %v754 = vpop.f32.mrf.mxu0
        %v755 = vadd.f32 0.0, %v754
        %v756 = vpop.f32.mrf.mxu0
        %v757 = vadd.f32 0.0, %v756
        %758 = vmatprep.mubr.f32.mxu0 0.0
        %759 = vmatmul.mubr.f32.gmra.mxu0 %v432
        %v760 = vpop.f32.mrf.mxu0
        %v761 = vadd.f32 0.0, %v760
        %v762 = vpop.f32.mrf.mxu0
        %v763 = vadd.f32 0.0, %v762
        %764 = vmatprep.mubr.f32.mxu0 0.0
        %765 = vmatmul.mubr.f32.gmra.mxu0 %v435
        %v766 = vpop.f32.mrf.mxu0
        %v767 = vadd.f32 0.0, %v766
        %v768 = vpop.f32.mrf.mxu0
        %v769 = vadd.f32 0.0, %v768
        %770 = vmatprep.mubr.f32.mxu0 0.0
        %771 = vmatmul.mubr.f32.gmra.mxu0 %v438
        %v772 = vpop.f32.mrf.mxu0
        %v773 = vadd.f32 0.0, %v772
        %v774 = vpop.f32.mrf.mxu0
        %v775 = vadd.f32 0.0, %v774
        %776 = vmatprep.mubr.f32.mxu0 0.0
        %777 = vmatmul.mubr.f32.gmra.mxu0 %v441
        %v778 = vpop.f32.mrf.mxu0
        %v779 = vadd.f32 0.0, %v778
        %v780 = vpop.f32.mrf.mxu0
        %v781 = vadd.f32 0.0, %v780
        %782 = vmatprep.mubr.f32.mxu0 0.0
        %783 = vmatmul.mubr.f32.gmra.mxu0 %v444
        %v784 = vpop.f32.mrf.mxu0
        %v785 = vadd.f32 0.0, %v784
        %v786 = vpop.f32.mrf.mxu0
        %v787 = vadd.f32 0.0, %v786
        %788 = vmatprep.mubr.f32.mxu0 0.0
        %789 = vmatmul.mubr.f32.gmra.mxu0 %v447
        %v790 = vpop.f32.mrf.mxu0
        %v791 = vadd.f32 0.0, %v790
        %v792 = vpop.f32.mrf.mxu0
        %v793 = vadd.f32 0.0, %v792
        %794 = vmatprep.mubr.f32.mxu0 0.0
        %795 = vmatmul.mubr.f32.gmra.mxu0 %v450
        %v796 = vpop.f32.mrf.mxu0
        %v797 = vadd.f32 0.0, %v796
        %v798 = vpop.f32.mrf.mxu0
        %v799 = vadd.f32 0.0, %v798
        %800 = vmatprep.mubr.f32.mxu0 0.0
        %801 = vmatmul.mubr.f32.gmra.mxu0 %v453
        %v802 = vpop.f32.mrf.mxu0
        %v803 = vadd.f32 0.0, %v802
        %v804 = vpop.f32.mrf.mxu0
        %v805 = vadd.f32 0.0, %v804
        %806 = vmatprep.mubr.f32.mxu0 0.0
        %807 = vmatmul.mubr.f32.gmra.mxu0 %v456
        %v808 = vpop.f32.mrf.mxu0
        %v809 = vadd.f32 0.0, %v808
        %v810 = vpop.f32.mrf.mxu0
        %v811 = vadd.f32 0.0, %v810
        %812 = vmatprep.mubr.f32.mxu0 0.0
        %813 = vmatmul.mubr.f32.gmra.mxu0 %v459
        %v814 = vpop.f32.mrf.mxu0
        %v815 = vadd.f32 0.0, %v814
        %v816 = vpop.f32.mrf.mxu0
        %v817 = vadd.f32 0.0, %v816
        %818 = vdwg.mxu0
        %v819 = vmax.f32 %v533, %v539
        %v820 = vmax.f32 %v819, %v545
        %v821 = vmax.f32 %v820, %v551
        %v822 = vrot.slane %v821, 4
        %v823 = vmax.f32 %v821, %v822
        %v824 = vrot.slane %v823, 2
        %v825 = vmax.f32 %v823, %v824
        %v826 = vrot.slane %v825, 1
        %v827 = vmax.f32 %v825, %v826
        %v828 = vmax.f32 %v535, %v541
        %v829 = vmax.f32 %v828, %v547
        %v830 = vmax.f32 %v829, %v553
        %v831 = vrot.slane %v830, 4
        %v832 = vmax.f32 %v830, %v831
        %v833 = vrot.slane %v832, 2
        %v834 = vmax.f32 %v832, %v833
        %v835 = vrot.slane %v834, 1
        %v836 = vmax.f32 %v834, %v835
        %v837 = vmax.f32 %v557, %v563
        %v838 = vmax.f32 %v837, %v569
        %v839 = vmax.f32 %v838, %v575
        %v840 = vrot.slane %v839, 4
        %v841 = vmax.f32 %v839, %v840
        %v842 = vrot.slane %v841, 2
        %v843 = vmax.f32 %v841, %v842
        %v844 = vrot.slane %v843, 1
        %v845 = vmax.f32 %v843, %v844
        %v846 = vmax.f32 %v559, %v565
        %v847 = vmax.f32 %v846, %v571
        %v848 = vmax.f32 %v847, %v577
        %v849 = vrot.slane %v848, 4
        %v850 = vmax.f32 %v848, %v849
        %v851 = vrot.slane %v850, 2
        %v852 = vmax.f32 %v850, %v851
        %v853 = vrot.slane %v852, 1
        %v854 = vmax.f32 %v852, %v853
        %v855 = vmax.f32 %v581, %v587
        %v856 = vmax.f32 %v855, %v593
        %v857 = vmax.f32 %v856, %v599
        %v858 = vrot.slane %v857, 4
        %v859 = vmax.f32 %v857, %v858
        %v860 = vrot.slane %v859, 2
        %v861 = vmax.f32 %v859, %v860
        %v862 = vrot.slane %v861, 1
        %v863 = vmax.f32 %v861, %v862
        %v864 = vmax.f32 %v583, %v589
        %v865 = vmax.f32 %v864, %v595
        %v866 = vmax.f32 %v865, %v601
        %v867 = vrot.slane %v866, 4
        %v868 = vmax.f32 %v866, %v867
        %v869 = vrot.slane %v868, 2
        %v870 = vmax.f32 %v868, %v869
        %v871 = vrot.slane %v870, 1
        %v872 = vmax.f32 %v870, %v871
        %v873 = vmax.f32 %v605, %v611
        %v874 = vmax.f32 %v873, %v617
        %v875 = vmax.f32 %v874, %v623
        %v876 = vrot.slane %v875, 4
        %v877 = vmax.f32 %v875, %v876
        %v878 = vrot.slane %v877, 2
        %v879 = vmax.f32 %v877, %v878
        %v880 = vrot.slane %v879, 1
        %v881 = vmax.f32 %v879, %v880
        %v882 = vmax.f32 %v607, %v613
        %v883 = vmax.f32 %v882, %v619
        %v884 = vmax.f32 %v883, %v625
        %v885 = vrot.slane %v884, 4
        %v886 = vmax.f32 %v884, %v885
        %v887 = vrot.slane %v886, 2
        %v888 = vmax.f32 %v886, %v887
        %v889 = vrot.slane %v888, 1
        %v890 = vmax.f32 %v888, %v889
        %v891 = vsub.f32 %v533, %v827
        %v892 = vsub.f32 %v535, %v836
        %v893 = vsub.f32 %v539, %v827
        %v894 = vsub.f32 %v541, %v836
        %v895 = vsub.f32 %v545, %v827
        %v896 = vsub.f32 %v547, %v836
        %v897 = vsub.f32 %v551, %v827
        %v898 = vsub.f32 %v553, %v836
        %v899 = vsub.f32 %v557, %v845
        %v900 = vsub.f32 %v559, %v854
        %v901 = vsub.f32 %v563, %v845
        %v902 = vsub.f32 %v565, %v854
        %v903 = vsub.f32 %v569, %v845
        %v904 = vsub.f32 %v571, %v854
        %v905 = vsub.f32 %v575, %v845
        %v906 = vsub.f32 %v577, %v854
        %v907 = vsub.f32 %v581, %v863
        %v908 = vsub.f32 %v583, %v872
        %v909 = vsub.f32 %v587, %v863
        %v910 = vsub.f32 %v589, %v872
        %v911 = vsub.f32 %v593, %v863
        %v912 = vsub.f32 %v595, %v872
        %v913 = vsub.f32 %v599, %v863
        %v914 = vsub.f32 %v601, %v872
        %v915 = vsub.f32 %v605, %v881
        %v916 = vsub.f32 %v607, %v890
        %v917 = vsub.f32 %v611, %v881
        %v918 = vsub.f32 %v613, %v890
        %v919 = vsub.f32 %v617, %v881
        %v920 = vsub.f32 %v619, %v890
        %v921 = vsub.f32 %v623, %v881
        %v922 = vsub.f32 %v625, %v890
        %v923 = vmul.f32 %v891, 1.442695
        %v924 = vpow.pop %v923
        %v925 = vmul.f32 %v892, 1.442695
        %v926 = vpow.pop %v925
        %v927 = vmul.f32 %v893, 1.442695
        %v928 = vpow.pop %v927
        %v929 = vmul.f32 %v894, 1.442695
        %v930 = vpow.pop %v929
        %v931 = vmul.f32 %v895, 1.442695
        %v932 = vpow.pop %v931
        %v933 = vmul.f32 %v896, 1.442695
        %v934 = vpow.pop %v933
        %v935 = vmul.f32 %v897, 1.442695
        %v936 = vpow.pop %v935
        %v937 = vmul.f32 %v898, 1.442695
        %v938 = vpow.pop %v937
        %v939 = vmul.f32 %v899, 1.442695
        %v940 = vpow.pop %v939
        %v941 = vmul.f32 %v900, 1.442695
        %v942 = vpow.pop %v941
        %v943 = vmul.f32 %v901, 1.442695
        %v944 = vpow.pop %v943
        %v945 = vmul.f32 %v902, 1.442695
        %v946 = vpow.pop %v945
        %v947 = vmul.f32 %v903, 1.442695
        %v948 = vpow.pop %v947
        %v949 = vmul.f32 %v904, 1.442695
        %v950 = vpow.pop %v949
        %v951 = vmul.f32 %v905, 1.442695
        %v952 = vpow.pop %v951
        %v953 = vmul.f32 %v906, 1.442695
        %v954 = vpow.pop %v953
        %v955 = vmul.f32 %v907, 1.442695
        %v956 = vpow.pop %v955
        %v957 = vmul.f32 %v908, 1.442695
        %v958 = vpow.pop %v957
        %v959 = vmul.f32 %v909, 1.442695
        %v960 = vpow.pop %v959
        %v961 = vmul.f32 %v910, 1.442695
        %v962 = vpow.pop %v961
        %v963 = vmul.f32 %v911, 1.442695
        %v964 = vpow.pop %v963
        %v965 = vmul.f32 %v912, 1.442695
        %v966 = vpow.pop %v965
        %v967 = vmul.f32 %v913, 1.442695
        %v968 = vpow.pop %v967
        %v969 = vmul.f32 %v914, 1.442695
        %v970 = vpow.pop %v969
        %v971 = vmul.f32 %v915, 1.442695
        %v972 = vpow.pop %v971
        %v973 = vmul.f32 %v916, 1.442695
        %v974 = vpow.pop %v973
        %v975 = vmul.f32 %v917, 1.442695
        %v976 = vpow.pop %v975
        %v977 = vmul.f32 %v918, 1.442695
        %v978 = vpow.pop %v977
        %v979 = vmul.f32 %v919, 1.442695
        %v980 = vpow.pop %v979
        %v981 = vmul.f32 %v920, 1.442695
        %v982 = vpow.pop %v981
        %v983 = vmul.f32 %v921, 1.442695
        %v984 = vpow.pop %v983
        %v985 = vmul.f32 %v922, 1.442695
        %v986 = vpow.pop %v985
        %v987 = vadd.f32 %v924, %v928
        %v988 = vadd.f32 %v987, %v932
        %v989 = vadd.f32 %v988, %v936
        %v990 = vrot.slane %v989, 4
        %v991 = vadd.f32 %v989, %v990
        %v992 = vrot.slane %v991, 2
        %v993 = vadd.f32 %v991, %v992
        %v994 = vrot.slane %v993, 1
        %v995 = vadd.f32 %v993, %v994
        %v996 = vadd.f32 %v926, %v930
        %v997 = vadd.f32 %v996, %v934
        %v998 = vadd.f32 %v997, %v938
        %v999 = vrot.slane %v998, 4
        %v1000 = vadd.f32 %v998, %v999
        %v1001 = vrot.slane %v1000, 2
        %v1002 = vadd.f32 %v1000, %v1001
        %v1003 = vrot.slane %v1002, 1
        %v1004 = vadd.f32 %v1002, %v1003
        %v1005 = vadd.f32 %v940, %v944
        %v1006 = vadd.f32 %v1005, %v948
        %v1007 = vadd.f32 %v1006, %v952
        %v1008 = vrot.slane %v1007, 4
        %v1009 = vadd.f32 %v1007, %v1008
        %v1010 = vrot.slane %v1009, 2
        %v1011 = vadd.f32 %v1009, %v1010
        %v1012 = vrot.slane %v1011, 1
        %v1013 = vadd.f32 %v1011, %v1012
        %v1014 = vadd.f32 %v942, %v946
        %v1015 = vadd.f32 %v1014, %v950
        %v1016 = vadd.f32 %v1015, %v954
        %v1017 = vrot.slane %v1016, 4
        %v1018 = vadd.f32 %v1016, %v1017
        %v1019 = vrot.slane %v1018, 2
        %v1020 = vadd.f32 %v1018, %v1019
        %v1021 = vrot.slane %v1020, 1
        %v1022 = vadd.f32 %v1020, %v1021
        %v1023 = vadd.f32 %v956, %v960
        %v1024 = vadd.f32 %v1023, %v964
        %v1025 = vadd.f32 %v1024, %v968
        %v1026 = vrot.slane %v1025, 4
        %v1027 = vadd.f32 %v1025, %v1026
        %v1028 = vrot.slane %v1027, 2
        %v1029 = vadd.f32 %v1027, %v1028
        %v1030 = vrot.slane %v1029, 1
        %v1031 = vadd.f32 %v1029, %v1030
        %v1032 = vadd.f32 %v958, %v962
        %v1033 = vadd.f32 %v1032, %v966
        %v1034 = vadd.f32 %v1033, %v970
        %v1035 = vrot.slane %v1034, 4
        %v1036 = vadd.f32 %v1034, %v1035
        %v1037 = vrot.slane %v1036, 2
        %v1038 = vadd.f32 %v1036, %v1037
        %v1039 = vrot.slane %v1038, 1
        %v1040 = vadd.f32 %v1038, %v1039
        %v1041 = vadd.f32 %v972, %v976
        %v1042 = vadd.f32 %v1041, %v980
        %v1043 = vadd.f32 %v1042, %v984
        %v1044 = vrot.slane %v1043, 4
        %v1045 = vadd.f32 %v1043, %v1044
        %v1046 = vrot.slane %v1045, 2
        %v1047 = vadd.f32 %v1045, %v1046
        %v1048 = vrot.slane %v1047, 1
        %v1049 = vadd.f32 %v1047, %v1048
        %v1050 = vadd.f32 %v974, %v978
        %v1051 = vadd.f32 %v1050, %v982
        %v1052 = vadd.f32 %v1051, %v986
        %v1053 = vrot.slane %v1052, 4
        %v1054 = vadd.f32 %v1052, %v1053
        %v1055 = vrot.slane %v1054, 2
        %v1056 = vadd.f32 %v1054, %v1055
        %v1057 = vrot.slane %v1056, 1
        %v1058 = vadd.f32 %v1056, %v1057
        %v1059 = vrcp.pop %v995
        %v1060 = vmul.f32 1.0, %v1059
        %v1061 = vrcp.pop %v1004
        %v1062 = vmul.f32 1.0, %v1061
        %v1063 = vrcp.pop %v1013
        %v1064 = vmul.f32 1.0, %v1063
        %v1065 = vrcp.pop %v1022
        %v1066 = vmul.f32 1.0, %v1065
        %v1067 = vrcp.pop %v1031
        %v1068 = vmul.f32 1.0, %v1067
        %v1069 = vrcp.pop %v1040
        %v1070 = vmul.f32 1.0, %v1069
        %v1071 = vrcp.pop %v1049
        %v1072 = vmul.f32 1.0, %v1071
        %v1073 = vrcp.pop %v1058
        %v1074 = vmul.f32 1.0, %v1073
        %v1075 = vmul.f32 %v924, %v1060
        %v1076 = vmul.f32 %v926, %v1062
        %v1077 = vmul.f32 %v928, %v1060
        %v1078 = vmul.f32 %v930, %v1062
        %v1079 = vmul.f32 %v932, %v1060
        %v1080 = vmul.f32 %v934, %v1062
        %v1081 = vmul.f32 %v936, %v1060
        %v1082 = vmul.f32 %v938, %v1062
        %v1083 = vmul.f32 %v940, %v1064
        %v1084 = vmul.f32 %v942, %v1066
        %v1085 = vmul.f32 %v944, %v1064
        %v1086 = vmul.f32 %v946, %v1066
        %v1087 = vmul.f32 %v948, %v1064
        %v1088 = vmul.f32 %v950, %v1066
        %v1089 = vmul.f32 %v952, %v1064
        %v1090 = vmul.f32 %v954, %v1066
        %v1091 = vmul.f32 %v956, %v1068
        %v1092 = vmul.f32 %v958, %v1070
        %v1093 = vmul.f32 %v960, %v1068
        %v1094 = vmul.f32 %v962, %v1070
        %v1095 = vmul.f32 %v964, %v1068
        %v1096 = vmul.f32 %v966, %v1070
        %v1097 = vmul.f32 %v968, %v1068
        %v1098 = vmul.f32 %v970, %v1070
        %v1099 = vmul.f32 %v972, %v1072
        %v1100 = vmul.f32 %v974, %v1074
        %v1101 = vmul.f32 %v976, %v1072
        %v1102 = vmul.f32 %v978, %v1074
        %v1103 = vmul.f32 %v980, %v1072
        %v1104 = vmul.f32 %v982, %v1074
        %v1105 = vmul.f32 %v984, %v1072
        %v1106 = vmul.f32 %v986, %v1074
        %v1107 = vmax.f32 %v629, %v631
        %1108 = vmax.xlane.f32.xlu0 %v1107
        %v1109 = vpop.xlane.xlu0 %1108
        %v1110 = vmax.f32 %v635, %v637
        %1111 = vmax.xlane.f32.xlu0 %v1110
        %v1112 = vpop.xlane.xlu0 %1111
        %v1113 = vmax.f32 %v641, %v643
        %1114 = vmax.xlane.f32.xlu0 %v1113
        %v1115 = vpop.xlane.xlu0 %1114
        %v1116 = vmax.f32 %v647, %v649
        %1117 = vmax.xlane.f32.xlu0 %v1116
        %v1118 = vpop.xlane.xlu0 %1117
        %v1119 = vmax.f32 %v653, %v655
        %1120 = vmax.xlane.f32.xlu0 %v1119
        %v1121 = vpop.xlane.xlu0 %1120
        %v1122 = vmax.f32 %v659, %v661
        %1123 = vmax.xlane.f32.xlu0 %v1122
        %v1124 = vpop.xlane.xlu0 %1123
        %v1125 = vmax.f32 %v665, %v667
        %1126 = vmax.xlane.f32.xlu0 %v1125
        %v1127 = vpop.xlane.xlu0 %1126
        %v1128 = vmax.f32 %v671, %v673
        %1129 = vmax.xlane.f32.xlu0 %v1128
        %v1130 = vpop.xlane.xlu0 %1129
        %v1131 = vmax.f32 %v677, %v679
        %1132 = vmax.xlane.f32.xlu0 %v1131
        %v1133 = vpop.xlane.xlu0 %1132
        %v1134 = vmax.f32 %v683, %v685
        %1135 = vmax.xlane.f32.xlu0 %v1134
        %v1136 = vpop.xlane.xlu0 %1135
        %v1137 = vmax.f32 %v689, %v691
        %1138 = vmax.xlane.f32.xlu0 %v1137
        %v1139 = vpop.xlane.xlu0 %1138
        %v1140 = vmax.f32 %v695, %v697
        %1141 = vmax.xlane.f32.xlu0 %v1140
        %v1142 = vpop.xlane.xlu0 %1141
        %v1143 = vmax.f32 %v701, %v703
        %1144 = vmax.xlane.f32.xlu0 %v1143
        %v1145 = vpop.xlane.xlu0 %1144
        %v1146 = vmax.f32 %v707, %v709
        %1147 = vmax.xlane.f32.xlu0 %v1146
        %v1148 = vpop.xlane.xlu0 %1147
        %v1149 = vmax.f32 %v713, %v715
        %1150 = vmax.xlane.f32.xlu0 %v1149
        %v1151 = vpop.xlane.xlu0 %1150
        %v1152 = vmax.f32 %v719, %v721
        %1153 = vmax.xlane.f32.xlu0 %v1152
        %v1154 = vpop.xlane.xlu0 %1153
        %v1155 = vsub.f32 %v629, %v1109
        %v1156 = vsub.f32 %v631, %v1109
        %v1157 = vsub.f32 %v635, %v1112
        %v1158 = vsub.f32 %v637, %v1112
        %v1159 = vsub.f32 %v641, %v1115
        %v1160 = vsub.f32 %v643, %v1115
        %v1161 = vsub.f32 %v647, %v1118
        %v1162 = vsub.f32 %v649, %v1118
        %v1163 = vsub.f32 %v653, %v1121
        %v1164 = vsub.f32 %v655, %v1121
        %v1165 = vsub.f32 %v659, %v1124
        %v1166 = vsub.f32 %v661, %v1124
        %v1167 = vsub.f32 %v665, %v1127
        %v1168 = vsub.f32 %v667, %v1127
        %v1169 = vsub.f32 %v671, %v1130
        %v1170 = vsub.f32 %v673, %v1130
        %v1171 = vsub.f32 %v677, %v1133
        %v1172 = vsub.f32 %v679, %v1133
        %v1173 = vsub.f32 %v683, %v1136
        %v1174 = vsub.f32 %v685, %v1136
        %v1175 = vsub.f32 %v689, %v1139
        %v1176 = vsub.f32 %v691, %v1139
        %v1177 = vsub.f32 %v695, %v1142
        %v1178 = vsub.f32 %v697, %v1142
        %v1179 = vsub.f32 %v701, %v1145
        %v1180 = vsub.f32 %v703, %v1145
        %v1181 = vsub.f32 %v707, %v1148
        %v1182 = vsub.f32 %v709, %v1148
        %v1183 = vsub.f32 %v713, %v1151
        %v1184 = vsub.f32 %v715, %v1151
        %v1185 = vsub.f32 %v719, %v1154
        %v1186 = vsub.f32 %v721, %v1154
        %v1187 = vmul.f32 %v1155, 1.442695
        %v1188 = vpow.pop %v1187
        %v1189 = vmul.f32 %v1156, 1.442695
        %v1190 = vpow.pop %v1189
        %v1191 = vmul.f32 %v1157, 1.442695
        %v1192 = vpow.pop %v1191
        %v1193 = vmul.f32 %v1158, 1.442695
        %v1194 = vpow.pop %v1193
        %v1195 = vmul.f32 %v1159, 1.442695
        %v1196 = vpow.pop %v1195
        %v1197 = vmul.f32 %v1160, 1.442695
        %v1198 = vpow.pop %v1197
        %v1199 = vmul.f32 %v1161, 1.442695
        %v1200 = vpow.pop %v1199
        %v1201 = vmul.f32 %v1162, 1.442695
        %v1202 = vpow.pop %v1201
        %v1203 = vmul.f32 %v1163, 1.442695
        %v1204 = vpow.pop %v1203
        %v1205 = vmul.f32 %v1164, 1.442695
        %v1206 = vpow.pop %v1205
        %v1207 = vmul.f32 %v1165, 1.442695
        %v1208 = vpow.pop %v1207
        %v1209 = vmul.f32 %v1166, 1.442695
        %v1210 = vpow.pop %v1209
        %v1211 = vmul.f32 %v1167, 1.442695
        %v1212 = vpow.pop %v1211
        %v1213 = vmul.f32 %v1168, 1.442695
        %v1214 = vpow.pop %v1213
        %v1215 = vmul.f32 %v1169, 1.442695
        %v1216 = vpow.pop %v1215
        %v1217 = vmul.f32 %v1170, 1.442695
        %v1218 = vpow.pop %v1217
        %v1219 = vmul.f32 %v1171, 1.442695
        %v1220 = vpow.pop %v1219
        %v1221 = vmul.f32 %v1172, 1.442695
        %v1222 = vpow.pop %v1221
        %v1223 = vmul.f32 %v1173, 1.442695
        %v1224 = vpow.pop %v1223
        %v1225 = vmul.f32 %v1174, 1.442695
        %v1226 = vpow.pop %v1225
        %v1227 = vmul.f32 %v1175, 1.442695
        %v1228 = vpow.pop %v1227
        %v1229 = vmul.f32 %v1176, 1.442695
        %v1230 = vpow.pop %v1229
        %v1231 = vmul.f32 %v1177, 1.442695
        %v1232 = vpow.pop %v1231
        %v1233 = vmul.f32 %v1178, 1.442695
        %v1234 = vpow.pop %v1233
        %v1235 = vmul.f32 %v1179, 1.442695
        %v1236 = vpow.pop %v1235
        %v1237 = vmul.f32 %v1180, 1.442695
        %v1238 = vpow.pop %v1237
        %v1239 = vmul.f32 %v1181, 1.442695
        %v1240 = vpow.pop %v1239
        %v1241 = vmul.f32 %v1182, 1.442695
        %v1242 = vpow.pop %v1241
        %v1243 = vmul.f32 %v1183, 1.442695
        %v1244 = vpow.pop %v1243
        %v1245 = vmul.f32 %v1184, 1.442695
        %v1246 = vpow.pop %v1245
        %v1247 = vmul.f32 %v1185, 1.442695
        %v1248 = vpow.pop %v1247
        %v1249 = vmul.f32 %v1186, 1.442695
        %v1250 = vpow.pop %v1249
        %v1251 = vadd.f32 %v1188, %v1190
        %1252 = vadd.xlane.f32.xlu0 %v1251
        %v1253 = vpop.xlane.xlu0 %1252
        %v1254 = vadd.f32 %v1192, %v1194
        %1255 = vadd.xlane.f32.xlu0 %v1254
        %v1256 = vpop.xlane.xlu0 %1255
        %v1257 = vadd.f32 %v1196, %v1198
        %1258 = vadd.xlane.f32.xlu0 %v1257
        %v1259 = vpop.xlane.xlu0 %1258
        %v1260 = vadd.f32 %v1200, %v1202
        %1261 = vadd.xlane.f32.xlu0 %v1260
        %v1262 = vpop.xlane.xlu0 %1261
        %v1263 = vadd.f32 %v1204, %v1206
        %1264 = vadd.xlane.f32.xlu0 %v1263
        %v1265 = vpop.xlane.xlu0 %1264
        %v1266 = vadd.f32 %v1208, %v1210
        %1267 = vadd.xlane.f32.xlu0 %v1266
        %v1268 = vpop.xlane.xlu0 %1267
        %v1269 = vadd.f32 %v1212, %v1214
        %1270 = vadd.xlane.f32.xlu0 %v1269
        %v1271 = vpop.xlane.xlu0 %1270
        %v1272 = vadd.f32 %v1216, %v1218
        %1273 = vadd.xlane.f32.xlu0 %v1272
        %v1274 = vpop.xlane.xlu0 %1273
        %v1275 = vadd.f32 %v1220, %v1222
        %1276 = vadd.xlane.f32.xlu0 %v1275
        %v1277 = vpop.xlane.xlu0 %1276
        %v1278 = vadd.f32 %v1224, %v1226
        %1279 = vadd.xlane.f32.xlu0 %v1278
        %v1280 = vpop.xlane.xlu0 %1279
        %v1281 = vadd.f32 %v1228, %v1230
        %1282 = vadd.xlane.f32.xlu0 %v1281
        %v1283 = vpop.xlane.xlu0 %1282
        %v1284 = vadd.f32 %v1232, %v1234
        %1285 = vadd.xlane.f32.xlu0 %v1284
        %v1286 = vpop.xlane.xlu0 %1285
        %v1287 = vadd.f32 %v1236, %v1238
        %1288 = vadd.xlane.f32.xlu0 %v1287
        %v1289 = vpop.xlane.xlu0 %1288
        %v1290 = vadd.f32 %v1240, %v1242
        %1291 = vadd.xlane.f32.xlu0 %v1290
        %v1292 = vpop.xlane.xlu0 %1291
        %v1293 = vadd.f32 %v1244, %v1246
        %1294 = vadd.xlane.f32.xlu0 %v1293
        %v1295 = vpop.xlane.xlu0 %1294
        %v1296 = vadd.f32 %v1248, %v1250
        %1297 = vadd.xlane.f32.xlu0 %v1296
        %v1298 = vpop.xlane.xlu0 %1297
        %v1299 = vrcp.pop %v1253
        %v1300 = vmul.f32 1.0, %v1299
        %v1301 = vrcp.pop %v1256
        %v1302 = vmul.f32 1.0, %v1301
        %v1303 = vrcp.pop %v1259
        %v1304 = vmul.f32 1.0, %v1303
        %v1305 = vrcp.pop %v1262
        %v1306 = vmul.f32 1.0, %v1305
        %v1307 = vrcp.pop %v1265
        %v1308 = vmul.f32 1.0, %v1307
        %v1309 = vrcp.pop %v1268
        %v1310 = vmul.f32 1.0, %v1309
        %v1311 = vrcp.pop %v1271
        %v1312 = vmul.f32 1.0, %v1311
        %v1313 = vrcp.pop %v1274
        %v1314 = vmul.f32 1.0, %v1313
        %v1315 = vrcp.pop %v1277
        %v1316 = vmul.f32 1.0, %v1315
        %v1317 = vrcp.pop %v1280
        %v1318 = vmul.f32 1.0, %v1317
        %v1319 = vrcp.pop %v1283
        %v1320 = vmul.f32 1.0, %v1319
        %v1321 = vrcp.pop %v1286
        %v1322 = vmul.f32 1.0, %v1321
        %v1323 = vrcp.pop %v1289
        %v1324 = vmul.f32 1.0, %v1323
        %v1325 = vrcp.pop %v1292
        %v1326 = vmul.f32 1.0, %v1325
        %v1327 = vrcp.pop %v1295
        %v1328 = vmul.f32 1.0, %v1327
        %v1329 = vrcp.pop %v1298
        %v1330 = vmul.f32 1.0, %v1329
        %v1331 = vmul.f32 %v1188, %v1300
        %v1332 = vmul.f32 %v1190, %v1300
        %v1333 = vmul.f32 %v1192, %v1302
        %v1334 = vmul.f32 %v1194, %v1302
        %v1335 = vmul.f32 %v1196, %v1304
        %v1336 = vmul.f32 %v1198, %v1304
        %v1337 = vmul.f32 %v1200, %v1306
        %v1338 = vmul.f32 %v1202, %v1306
        %v1339 = vmul.f32 %v1204, %v1308
        %v1340 = vmul.f32 %v1206, %v1308
        %v1341 = vmul.f32 %v1208, %v1310
        %v1342 = vmul.f32 %v1210, %v1310
        %v1343 = vmul.f32 %v1212, %v1312
        %v1344 = vmul.f32 %v1214, %v1312
        %v1345 = vmul.f32 %v1216, %v1314
        %v1346 = vmul.f32 %v1218, %v1314
        %v1347 = vmul.f32 %v1220, %v1316
        %v1348 = vmul.f32 %v1222, %v1316
        %v1349 = vmul.f32 %v1224, %v1318
        %v1350 = vmul.f32 %v1226, %v1318
        %v1351 = vmul.f32 %v1228, %v1320
        %v1352 = vmul.f32 %v1230, %v1320
        %v1353 = vmul.f32 %v1232, %v1322
        %v1354 = vmul.f32 %v1234, %v1322
        %v1355 = vmul.f32 %v1236, %v1324
        %v1356 = vmul.f32 %v1238, %v1324
        %v1357 = vmul.f32 %v1240, %v1326
        %v1358 = vmul.f32 %v1242, %v1326
        %v1359 = vmul.f32 %v1244, %v1328
        %v1360 = vmul.f32 %v1246, %v1328
        %v1361 = vmul.f32 %v1248, %v1330
        %v1362 = vmul.f32 %v1250, %v1330
        %1363 = vmatprep.subr.mxu0 %v1362
        %1364 = vmatpush1.xpose.msra.mxu0 %v1361
        %1365 = vmatprep.subr.mxu0 %v1360
        %1366 = vmatpush1.xpose.msra.mxu0 %v1359
        %1367 = vmatprep.subr.mxu0 %v1358
        %1368 = vmatpush1.xpose.msra.mxu0 %v1357
        %1369 = vmatprep.subr.mxu0 %v1356
        %1370 = vmatpush1.xpose.msra.mxu0 %v1355
        %1371 = vmatprep.subr.mxu0 %v1354
        %1372 = vmatpush1.xpose.msra.mxu0 %v1353
        %1373 = vmatprep.subr.mxu0 %v1352
        %1374 = vmatpush1.xpose.msra.mxu0 %v1351
        %1375 = vmatprep.subr.mxu0 %v1350
        %1376 = vmatpush1.xpose.msra.mxu0 %v1349
        %1377 = vmatprep.subr.mxu0 %v1348
        %1378 = vmatpush1.xpose.msra.mxu0 %v1347
        %1379 = vmatprep.subr.mxu0 %v1346
        %1380 = vmatpush1.xpose.msra.mxu0 %v1345
        %1381 = vmatprep.subr.mxu0 %v1344
        %1382 = vmatpush1.xpose.msra.mxu0 %v1343
        %1383 = vmatprep.subr.mxu0 %v1342
        %1384 = vmatpush1.xpose.msra.mxu0 %v1341
        %1385 = vmatprep.subr.mxu0 %v1340
        %1386 = vmatpush1.xpose.msra.mxu0 %v1339
        %1387 = vmatprep.subr.mxu0 %v1338
        %1388 = vmatpush1.xpose.msra.mxu0 %v1337
        %1389 = vmatprep.subr.mxu0 %v1336
        %1390 = vmatpush1.xpose.msra.mxu0 %v1335
        %1391 = vmatprep.subr.mxu0 %v1334
        %1392 = vmatpush1.xpose.msra.mxu0 %v1333
        %1393 = vmatprep.subr.mxu0 %v1332
        %1394 = vmatpush1.xpose.msra.mxu0 %v1331
        %1395 = vmatprep.subr.mxu0 0.0
        %1396 = vmatpush2.xpose.msra.mxu0 0.0
        %1397 = vmatprep.subr.mxu0 0.0
        %1398 = vmatpush2.xpose.msra.mxu0 0.0
        %1399 = vmatprep.subr.mxu0 0.0
        %1400 = vmatpush2.xpose.msra.mxu0 0.0
        %1401 = vmatprep.subr.mxu0 0.0
        %1402 = vmatpush2.xpose.msra.mxu0 0.0
        %1403 = vmatprep.subr.mxu0 0.0
        %1404 = vmatpush2.xpose.msra.mxu0 0.0
        %1405 = vmatprep.subr.mxu0 0.0
        %1406 = vmatpush2.xpose.msra.mxu0 0.0
        %1407 = vmatprep.subr.mxu0 0.0
        %1408 = vmatpush2.xpose.msra.mxu0 0.0
        %1409 = vmatprep.subr.mxu0 0.0
        %1410 = vmatpush2.xpose.msra.mxu0 0.0
        %1411 = vmatprep.subr.mxu0 0.0
        %1412 = vmatpush2.xpose.msra.mxu0 0.0
        %1413 = vmatprep.subr.mxu0 0.0
        %1414 = vmatpush2.xpose.msra.mxu0 0.0
        %1415 = vmatprep.subr.mxu0 0.0
        %1416 = vmatpush2.xpose.msra.mxu0 0.0
        %1417 = vmatprep.subr.mxu0 0.0
        %1418 = vmatpush2.xpose.msra.mxu0 0.0
        %1419 = vmatprep.subr.mxu0 0.0
        %1420 = vmatpush2.xpose.msra.mxu0 0.0
        %1421 = vmatprep.subr.mxu0 0.0
        %1422 = vmatpush2.xpose.msra.mxu0 0.0
        %1423 = vmatprep.subr.mxu0 0.0
        %1424 = vmatpush2.xpose.msra.mxu0 0.0
        %1425 = vmatprep.subr.mxu0 0.0
        %1426 = vmatpush2.xpose.msra.mxu0 0.0
        %1427 = vmatprep.mubr.f32.mxu0 %v727
        %1428 = vmatmul.mubr.f32.gmra.mxu0 %v725
        %v1429 = vpop.f32.mrf.mxu0
        %v1430 = vadd.f32 0.0, %v1429
        %v1431 = vpop.f32.mrf.mxu0
        %1432 = vmatprep.mubr.f32.mxu0 %v733
        %1433 = vmatmul.mubr.f32.gmra.mxu0 %v731
        %v1434 = vpop.f32.mrf.mxu0
        %v1435 = vadd.f32 0.0, %v1434
        %v1436 = vpop.f32.mrf.mxu0
        %1437 = vmatprep.mubr.f32.mxu0 %v739
        %1438 = vmatmul.mubr.f32.gmra.mxu0 %v737
        %v1439 = vpop.f32.mrf.mxu0
        %v1440 = vadd.f32 0.0, %v1439
        %v1441 = vpop.f32.mrf.mxu0
        %1442 = vmatprep.mubr.f32.mxu0 %v745
        %1443 = vmatmul.mubr.f32.gmra.mxu0 %v743
        %v1444 = vpop.f32.mrf.mxu0
        %v1445 = vadd.f32 0.0, %v1444
        %v1446 = vpop.f32.mrf.mxu0
        %1447 = vmatprep.mubr.f32.mxu0 %v751
        %1448 = vmatmul.mubr.f32.gmra.mxu0 %v749
        %v1449 = vpop.f32.mrf.mxu0
        %v1450 = vadd.f32 0.0, %v1449
        %v1451 = vpop.f32.mrf.mxu0
        %1452 = vmatprep.mubr.f32.mxu0 %v757
        %1453 = vmatmul.mubr.f32.gmra.mxu0 %v755
        %v1454 = vpop.f32.mrf.mxu0
        %v1455 = vadd.f32 0.0, %v1454
        %v1456 = vpop.f32.mrf.mxu0
        %1457 = vmatprep.mubr.f32.mxu0 %v763
        %1458 = vmatmul.mubr.f32.gmra.mxu0 %v761
        %v1459 = vpop.f32.mrf.mxu0
        %v1460 = vadd.f32 0.0, %v1459
        %v1461 = vpop.f32.mrf.mxu0
        %1462 = vmatprep.mubr.f32.mxu0 %v769
        %1463 = vmatmul.mubr.f32.gmra.mxu0 %v767
        %v1464 = vpop.f32.mrf.mxu0
        %v1465 = vadd.f32 0.0, %v1464
        %v1466 = vpop.f32.mrf.mxu0
        %1467 = vmatprep.mubr.f32.mxu0 %v775
        %1468 = vmatmul.mubr.f32.gmra.mxu0 %v773
        %v1469 = vpop.f32.mrf.mxu0
        %v1470 = vadd.f32 0.0, %v1469
        %v1471 = vpop.f32.mrf.mxu0
        %1472 = vmatprep.mubr.f32.mxu0 %v781
        %1473 = vmatmul.mubr.f32.gmra.mxu0 %v779
        %v1474 = vpop.f32.mrf.mxu0
        %v1475 = vadd.f32 0.0, %v1474
        %v1476 = vpop.f32.mrf.mxu0
        %1477 = vmatprep.mubr.f32.mxu0 %v787
        %1478 = vmatmul.mubr.f32.gmra.mxu0 %v785
        %v1479 = vpop.f32.mrf.mxu0
        %v1480 = vadd.f32 0.0, %v1479
        %v1481 = vpop.f32.mrf.mxu0
        %1482 = vmatprep.mubr.f32.mxu0 %v793
        %1483 = vmatmul.mubr.f32.gmra.mxu0 %v791
        %v1484 = vpop.f32.mrf.mxu0
        %v1485 = vadd.f32 0.0, %v1484
        %v1486 = vpop.f32.mrf.mxu0
        %1487 = vmatprep.mubr.f32.mxu0 %v799
        %1488 = vmatmul.mubr.f32.gmra.mxu0 %v797
        %v1489 = vpop.f32.mrf.mxu0
        %v1490 = vadd.f32 0.0, %v1489
        %v1491 = vpop.f32.mrf.mxu0
        %1492 = vmatprep.mubr.f32.mxu0 %v805
        %1493 = vmatmul.mubr.f32.gmra.mxu0 %v803
        %v1494 = vpop.f32.mrf.mxu0
        %v1495 = vadd.f32 0.0, %v1494
        %v1496 = vpop.f32.mrf.mxu0
        %1497 = vmatprep.mubr.f32.mxu0 %v811
        %1498 = vmatmul.mubr.f32.gmra.mxu0 %v809
        %v1499 = vpop.f32.mrf.mxu0
        %v1500 = vadd.f32 0.0, %v1499
        %v1501 = vpop.f32.mrf.mxu0
        %1502 = vmatprep.mubr.f32.mxu0 %v817
        %1503 = vmatmul.mubr.f32.gmra.mxu0 %v815
        %v1504 = vpop.f32.mrf.mxu0
        %v1505 = vadd.f32 0.0, %v1504
        %v1506 = vpop.f32.mrf.mxu0
        %1507 = vdwg.mxu0
        %v1508 = vmul.f32 %v1430, %v297
        %v1509 = vmul.f32 %v1435, %v298
        %v1510 = vmul.f32 %v1440, %v299
        %v1511 = vmul.f32 %v1445, %v300
        %v1512 = vmul.f32 %v1450, %v301
        %v1513 = vmul.f32 %v1455, %v302
        %v1514 = vmul.f32 %v1460, %v303
        %v1515 = vmul.f32 %v1465, %v304
        %v1516 = vmul.f32 %v1470, %v305
        %v1517 = vmul.f32 %v1475, %v306
        %v1518 = vmul.f32 %v1480, %v307
        %v1519 = vmul.f32 %v1485, %v308
        %v1520 = vmul.f32 %v1490, %v309
        %v1521 = vmul.f32 %v1495, %v310
        %v1522 = vmul.f32 %v1500, %v311
        %v1523 = vmul.f32 %v1505, %v312
        %1524 = vmatprep.subr.mxu0 %v1106
        %1525 = vmatpush1.msra.mxu0 %v1105
        %1526 = vmatprep.subr.mxu0 %v1104
        %1527 = vmatpush1.msra.mxu0 %v1103
        %1528 = vmatprep.subr.mxu0 %v1102
        %1529 = vmatpush1.msra.mxu0 %v1101
        %1530 = vmatprep.subr.mxu0 %v1100
        %1531 = vmatpush1.msra.mxu0 %v1099
        %1532 = vmatprep.subr.mxu0 %v1098
        %1533 = vmatpush1.msra.mxu0 %v1097
        %1534 = vmatprep.subr.mxu0 %v1096
        %1535 = vmatpush1.msra.mxu0 %v1095
        %1536 = vmatprep.subr.mxu0 %v1094
        %1537 = vmatpush1.msra.mxu0 %v1093
        %1538 = vmatprep.subr.mxu0 %v1092
        %1539 = vmatpush1.msra.mxu0 %v1091
        %1540 = vmatprep.subr.mxu0 %v1090
        %1541 = vmatpush1.msra.mxu0 %v1089
        %1542 = vmatprep.subr.mxu0 %v1088
        %1543 = vmatpush1.msra.mxu0 %v1087
        %1544 = vmatprep.subr.mxu0 %v1086
        %1545 = vmatpush1.msra.mxu0 %v1085
        %1546 = vmatprep.subr.mxu0 %v1084
        %1547 = vmatpush1.msra.mxu0 %v1083
        %1548 = vmatprep.subr.mxu0 %v1082
        %1549 = vmatpush1.msra.mxu0 %v1081
        %1550 = vmatprep.subr.mxu0 %v1080
        %1551 = vmatpush1.msra.mxu0 %v1079
        %1552 = vmatprep.subr.mxu0 %v1078
        %1553 = vmatpush1.msra.mxu0 %v1077
        %1554 = vmatprep.subr.mxu0 %v1076
        %1555 = vmatpush1.msra.mxu0 %v1075
        %1556 = vmatprep.subr.mxu0 0.0
        %1557 = vmatpush2.msra.mxu0 0.0
        %1558 = vmatprep.subr.mxu0 0.0
        %1559 = vmatpush2.msra.mxu0 0.0
        %1560 = vmatprep.subr.mxu0 0.0
        %1561 = vmatpush2.msra.mxu0 0.0
        %1562 = vmatprep.subr.mxu0 0.0
        %1563 = vmatpush2.msra.mxu0 0.0
        %1564 = vmatprep.subr.mxu0 0.0
        %1565 = vmatpush2.msra.mxu0 0.0
        %1566 = vmatprep.subr.mxu0 0.0
        %1567 = vmatpush2.msra.mxu0 0.0
        %1568 = vmatprep.subr.mxu0 0.0
        %1569 = vmatpush2.msra.mxu0 0.0
        %1570 = vmatprep.subr.mxu0 0.0
        %1571 = vmatpush2.msra.mxu0 0.0
        %1572 = vmatprep.subr.mxu0 0.0
        %1573 = vmatpush2.msra.mxu0 0.0
        %1574 = vmatprep.subr.mxu0 0.0
        %1575 = vmatpush2.msra.mxu0 0.0
        %1576 = vmatprep.subr.mxu0 0.0
        %1577 = vmatpush2.msra.mxu0 0.0
        %1578 = vmatprep.subr.mxu0 0.0
        %1579 = vmatpush2.msra.mxu0 0.0
        %1580 = vmatprep.subr.mxu0 0.0
        %1581 = vmatpush2.msra.mxu0 0.0
        %1582 = vmatprep.subr.mxu0 0.0
        %1583 = vmatpush2.msra.mxu0 0.0
        %1584 = vmatprep.subr.mxu0 0.0
        %1585 = vmatpush2.msra.mxu0 0.0
        %1586 = vmatprep.subr.mxu0 0.0
        %1587 = vmatpush2.msra.mxu0 0.0
        %1588 = vmatprep.mubr.f32.mxu0 0.0
        %1589 = vmatmul.mubr.f32.gmra.mxu0 %v1508
        %v1590 = vpop.f32.mrf.mxu0
        %v1591 = vadd.f32 0.0, %v1590
        %v1592 = vpop.f32.mrf.mxu0
        %v1593 = vadd.f32 0.0, %v1592
        %1594 = vmatprep.mubr.f32.mxu0 0.0
        %1595 = vmatmul.mubr.f32.gmra.mxu0 %v1509
        %v1596 = vpop.f32.mrf.mxu0
        %v1597 = vadd.f32 0.0, %v1596
        %v1598 = vpop.f32.mrf.mxu0
        %v1599 = vadd.f32 0.0, %v1598
        %1600 = vmatprep.mubr.f32.mxu0 0.0
        %1601 = vmatmul.mubr.f32.gmra.mxu0 %v1510
        %v1602 = vpop.f32.mrf.mxu0
        %v1603 = vadd.f32 0.0, %v1602
        %v1604 = vpop.f32.mrf.mxu0
        %v1605 = vadd.f32 0.0, %v1604
        %1606 = vmatprep.mubr.f32.mxu0 0.0
        %1607 = vmatmul.mubr.f32.gmra.mxu0 %v1511
        %v1608 = vpop.f32.mrf.mxu0
        %v1609 = vadd.f32 0.0, %v1608
        %v1610 = vpop.f32.mrf.mxu0
        %v1611 = vadd.f32 0.0, %v1610
        %1612 = vmatprep.mubr.f32.mxu0 0.0
        %1613 = vmatmul.mubr.f32.gmra.mxu0 %v1512
        %v1614 = vpop.f32.mrf.mxu0
        %v1615 = vadd.f32 0.0, %v1614
        %v1616 = vpop.f32.mrf.mxu0
        %v1617 = vadd.f32 0.0, %v1616
        %1618 = vmatprep.mubr.f32.mxu0 0.0
        %1619 = vmatmul.mubr.f32.gmra.mxu0 %v1513
        %v1620 = vpop.f32.mrf.mxu0
        %v1621 = vadd.f32 0.0, %v1620
        %v1622 = vpop.f32.mrf.mxu0
        %v1623 = vadd.f32 0.0, %v1622
        %1624 = vmatprep.mubr.f32.mxu0 0.0
        %1625 = vmatmul.mubr.f32.gmra.mxu0 %v1514
        %v1626 = vpop.f32.mrf.mxu0
        %v1627 = vadd.f32 0.0, %v1626
        %v1628 = vpop.f32.mrf.mxu0
        %v1629 = vadd.f32 0.0, %v1628
        %1630 = vmatprep.mubr.f32.mxu0 0.0
        %1631 = vmatmul.mubr.f32.gmra.mxu0 %v1515
        %v1632 = vpop.f32.mrf.mxu0
        %v1633 = vadd.f32 0.0, %v1632
        %v1634 = vpop.f32.mrf.mxu0
        %v1635 = vadd.f32 0.0, %v1634
        %1636 = vmatprep.mubr.f32.mxu0 0.0
        %1637 = vmatmul.mubr.f32.gmra.mxu0 %v1516
        %v1638 = vpop.f32.mrf.mxu0
        %v1639 = vadd.f32 0.0, %v1638
        %v1640 = vpop.f32.mrf.mxu0
        %v1641 = vadd.f32 0.0, %v1640
        %1642 = vmatprep.mubr.f32.mxu0 0.0
        %1643 = vmatmul.mubr.f32.gmra.mxu0 %v1517
        %v1644 = vpop.f32.mrf.mxu0
        %v1645 = vadd.f32 0.0, %v1644
        %v1646 = vpop.f32.mrf.mxu0
        %v1647 = vadd.f32 0.0, %v1646
        %1648 = vmatprep.mubr.f32.mxu0 0.0
        %1649 = vmatmul.mubr.f32.gmra.mxu0 %v1518
        %v1650 = vpop.f32.mrf.mxu0
        %v1651 = vadd.f32 0.0, %v1650
        %v1652 = vpop.f32.mrf.mxu0
        %v1653 = vadd.f32 0.0, %v1652
        %1654 = vmatprep.mubr.f32.mxu0 0.0
        %1655 = vmatmul.mubr.f32.gmra.mxu0 %v1519
        %v1656 = vpop.f32.mrf.mxu0
        %v1657 = vadd.f32 0.0, %v1656
        %v1658 = vpop.f32.mrf.mxu0
        %v1659 = vadd.f32 0.0, %v1658
        %1660 = vmatprep.mubr.f32.mxu0 0.0
        %1661 = vmatmul.mubr.f32.gmra.mxu0 %v1520
        %v1662 = vpop.f32.mrf.mxu0
        %v1663 = vadd.f32 0.0, %v1662
        %v1664 = vpop.f32.mrf.mxu0
        %v1665 = vadd.f32 0.0, %v1664
        %1666 = vmatprep.mubr.f32.mxu0 0.0
        %1667 = vmatmul.mubr.f32.gmra.mxu0 %v1521
        %v1668 = vpop.f32.mrf.mxu0
        %v1669 = vadd.f32 0.0, %v1668
        %v1670 = vpop.f32.mrf.mxu0
        %v1671 = vadd.f32 0.0, %v1670
        %1672 = vmatprep.mubr.f32.mxu0 0.0
        %1673 = vmatmul.mubr.f32.gmra.mxu0 %v1522
        %v1674 = vpop.f32.mrf.mxu0
        %v1675 = vadd.f32 0.0, %v1674
        %v1676 = vpop.f32.mrf.mxu0
        %v1677 = vadd.f32 0.0, %v1676
        %1678 = vmatprep.mubr.f32.mxu0 0.0
        %1679 = vmatmul.mubr.f32.gmra.mxu0 %v1523
        %v1680 = vpop.f32.mrf.mxu0
        %v1681 = vadd.f32 0.0, %v1680
        %v1682 = vpop.f32.mrf.mxu0
        %v1683 = vadd.f32 0.0, %v1682
        %1684 = vdwg.mxu0
        %1686 = vset.pattern.permute.xlu0 0
        %1687 = vperm.xlu0 %1686, %v245
        %v1688 = vpop.permute.xlu0 %1687
        %1690 = vmatprep.subr.mxu0 %v1683
        %1691 = vmatpush1.msra.mxu0 %v1681
        %1692 = vmatprep.subr.mxu0 %v1677
        %1693 = vmatpush1.msra.mxu0 %v1675
        %1694 = vmatprep.subr.mxu0 %v1671
        %1695 = vmatpush1.msra.mxu0 %v1669
        %1696 = vmatprep.subr.mxu0 %v1665
        %1697 = vmatpush1.msra.mxu0 %v1663
        %1698 = vmatprep.subr.mxu0 %v1659
        %1699 = vmatpush1.msra.mxu0 %v1657
        %1700 = vmatprep.subr.mxu0 %v1653
        %1701 = vmatpush1.msra.mxu0 %v1651
        %1702 = vmatprep.subr.mxu0 %v1647
        %1703 = vmatpush1.msra.mxu0 %v1645
        %1704 = vmatprep.subr.mxu0 %v1641
        %1705 = vmatpush1.msra.mxu0 %v1639
        %1706 = vmatprep.subr.mxu0 %v1635
        %1707 = vmatpush1.msra.mxu0 %v1633
        %1708 = vmatprep.subr.mxu0 %v1629
        %1709 = vmatpush1.msra.mxu0 %v1627
        %1710 = vmatprep.subr.mxu0 %v1623
        %1711 = vmatpush1.msra.mxu0 %v1621
        %1712 = vmatprep.subr.mxu0 %v1617
        %1713 = vmatpush1.msra.mxu0 %v1615
        %1714 = vmatprep.subr.mxu0 %v1611
        %1715 = vmatpush1.msra.mxu0 %v1609
        %1716 = vmatprep.subr.mxu0 %v1605
        %1717 = vmatpush1.msra.mxu0 %v1603
        %1718 = vmatprep.subr.mxu0 %v1599
        %1719 = vmatpush1.msra.mxu0 %v1597
        %1720 = vmatprep.subr.mxu0 %v1593
        %1721 = vmatpush1.msra.mxu0 %v1591
        %1722 = vmatprep.subr.mxu0 0.0
        %1723 = vmatpush2.msra.mxu0 0.0
        %1724 = vmatprep.subr.mxu0 0.0
        %1725 = vmatpush2.msra.mxu0 0.0
        %1726 = vmatprep.subr.mxu0 0.0
        %1727 = vmatpush2.msra.mxu0 0.0
        %1728 = vmatprep.subr.mxu0 0.0
        %1729 = vmatpush2.msra.mxu0 0.0
        %1730 = vmatprep.subr.mxu0 0.0
        %1731 = vmatpush2.msra.mxu0 0.0
        %1732 = vmatprep.subr.mxu0 0.0
        %1733 = vmatpush2.msra.mxu0 0.0
        %1734 = vmatprep.subr.mxu0 0.0
        %1735 = vmatpush2.msra.mxu0 0.0
        %1736 = vmatprep.subr.mxu0 0.0
        %1737 = vmatpush2.msra.mxu0 0.0
        %1738 = vmatprep.subr.mxu0 0.0
        %1739 = vmatpush2.msra.mxu0 0.0
        %1740 = vmatprep.subr.mxu0 0.0
        %1741 = vmatpush2.msra.mxu0 0.0
        %1742 = vmatprep.subr.mxu0 0.0
        %1743 = vmatpush2.msra.mxu0 0.0
        %1744 = vmatprep.subr.mxu0 0.0
        %1745 = vmatpush2.msra.mxu0 0.0
        %1746 = vmatprep.subr.mxu0 0.0
        %1747 = vmatpush2.msra.mxu0 0.0
        %1748 = vmatprep.subr.mxu0 0.0
        %1749 = vmatpush2.msra.mxu0 0.0
        %1750 = vmatprep.subr.mxu0 0.0
        %1751 = vmatpush2.msra.mxu0 0.0
        %1752 = vmatprep.subr.mxu0 0.0
        %1753 = vmatpush2.msra.mxu0 0.0
        %1754 = vmatprep.mubr.f32.mxu0 0.0
        %1755 = vmatmul.mubr.f32.gmra.mxu0 %v244
        %v1756 = vpop.f32.mrf.mxu0
        %v1757 = vadd.f32 %v1688, %v1756
        %v1758 = vpop.f32.mrf.mxu0
        %v1759 = vadd.f32 %v1688, %v1758
        %1760 = vdwg.mxu0
        %v1761 = vmul.f32 %v1757, %v1757
        %v1762 = vmul.f32 %v1759, %v1759
        %v1763 = vsel %vm461, %v1761, 0.0
        %v1764 = vrot.slane %v1763, 4
        %v1765 = vadd.f32 %v1763, %v1764
        %v1766 = vrot.slane %v1765, 2
        %v1767 = vadd.f32 %v1765, %v1766
        %v1768 = vrot.slane %v1767, 1
        %v1769 = vadd.f32 %v1767, %v1768
        %v1770 = vsel %vm461, %v1762, 0.0
        %v1771 = vrot.slane %v1770, 4
        %v1772 = vadd.f32 %v1770, %v1771
        %v1773 = vrot.slane %v1772, 2
        %v1774 = vadd.f32 %v1772, %v1773
        %v1775 = vrot.slane %v1774, 1
        %v1776 = vadd.f32 %v1774, %v1775
        %v1777 = vmax.f32 %v1769, 1e-24
        %v1778 = vmax.f32 %v1776, 1e-24
        %v1779 = vrsqrt.pop %v1777
        %v1780 = vrsqrt.pop %v1778
        %v1781 = vmul.f32 %v1757, %v1779
        %v1782 = vmul.f32 %v1759, %v1780
        %1783 = vset.pattern.permute.xlu0 1
        %1784 = vperm.xlu0 %1783, %v245
        %v1785 = vpop.permute.xlu0 %1784
        %v1787 = vmul.f32 %v1781, %v1785
        %v1788 = vmul.f32 %v1782, %v1785
        %v1791 = vcombine.low %v1787, %v1788
        %1793 = vst [vmem:[%s190] sm:$0xff] %v1791
        %s1794 = sand.u32 %s115, 1
        %s1795 = scalar_lea.sflag [#allocation3], %s1794
        %s1796 = sand.u32 %s115, 1
        %s1797 = smul.addr %s1796, 8
        %s1798 = scalar_lea.vmem [#allocation2], %s1797
        // Predicated region
        $region37: #{tpu_custom_call.1} parent=35 // pred_check
          %p1799 = pneg %p125
        $region38: #{tpu_custom_call.1} parent=35 // pred_check_branch
          %1801 = sbr.rel (%p1799) target = $region40
        $region39: #{tpu_custom_call.1} parent=35 // pred_region
          %s1803 = ssub.s32 128, 128
          %1804 = vsyncadd %s1795, %s1803
          %s1805 = smul.addr %s18, 2
          %s1806 = smul.addr %s1805, 64
          %s1807 = scalar_lea.hbm %s4, %s1806
          %s1809 = sshll.u32 %s1798, 4
          %s1810 = int_to_ptr.vmem [resolvable:$true] %s1809
          %1812 = dma.vmem_to_hbm [thread:$0]  %s1810, 128, %s1807, %s1795
        $region40: #{tpu_custom_call.1} parent=35 // pred_fallthru
          _
      $region36: #{tpu_custom_call.1} parent=5 // pred_fallthru
        _
      %p1813 = scmp.le.s32.totalorder 2, %s13
      // Predicated region
      $region41: #{tpu_custom_call.1} parent=5 // pred_check
        %p1814 = pneg %p1813
      $region42: #{tpu_custom_call.1} parent=5 // pred_check_branch
        %1816 = sbr.rel (%p1814) target = $region44
      $region43: #{tpu_custom_call.1} parent=5 // pred_region
        %s1817 = ssub.s32 %s13, 2
        // Predicated region
        $region45: #{tpu_custom_call.1} parent=43 // pred_check
          %p1818 = pneg %p131
        $region46: #{tpu_custom_call.1} parent=43 // pred_check_branch
          %1820 = sbr.rel (%p1818) target = $region48
        $region47: #{tpu_custom_call.1} parent=43 // pred_region
          %s1821 = sand.u32 %s116, 1
          %s1822 = scalar_lea.sflag [#allocation3], %s1821
          %s1823 = sand.u32 %s116, 1
          %s1824 = smul.addr %s1823, 8
          %s1825 = scalar_lea.vmem [#allocation2], %s1824
          %1826 = dma.done %s1822, 128
        $region48: #{tpu_custom_call.1} parent=43 // pred_fallthru
          _
      $region44: #{tpu_custom_call.1} parent=5 // pred_fallthru
        _
    $region6: #{tpu_custom_call.1} parent=1 // loop_footer
      %s17 = sadd.s32 1, %s13
    $region7: #{tpu_custom_call.1} parent=1 // loop_footer_branch
      %12 = sbr.rel target = $region3
    $region8: #{tpu_custom_call.1} parent=1 // loop_exit
      _
    %1827 = vsyncpa [#allocation3], 1
    %s1828 = scalar_lea.sflag [#allocation3], 1
    %1829 = vsyncpa %s1828, 1

</llo_original>
